<compile_context>
chip_gen: v5e
topology: v5e:2x2
jax: 0.10.0
libtpu: 0.0.40
codegen_flags: <defaults>
</compile_context>

<pallas_src>
import functools

import jax
import jax.numpy as jnp
from jax.experimental import pallas as pl
from jax.experimental.pallas import tpu as pltpu

LEAKY_SLOPE = 0.1
BN_EPS = 1e-5
_PAD = 4   # extra rows per per-image plane block: 1 halo above + 1 below + 2 alignment
_OFS = 2   # interior row offset inside each block (even -> whole packed bf16 row pairs)


# ----------------------------------------------------------------------------
# Host-side weight / parameter packing  (call ONCE, outside jit / the recurrence loop)
# ----------------------------------------------------------------------------
def _row_conv_weights(w_hwio, W):
    """Fold a 3x3 HWIO conv into 3 block-Toeplitz matrices, column padding folded in.

    Returns T of shape (3, W*Cin, W*Cout), bf16, such that for a row-flattened activation
    plane (zero rows above/below each image handle the row padding):

        conv3x3(x)[h, :] == sum_kh  P[row(h-1) + kh, :] @ T[kh]        (length W*Cout)
    """
    _, _, ci, co = w_hwio.shape
    q = jnp.arange(W)[:, None]              # input (plane) column index
    wc = jnp.arange(W)[None, :]             # output column index
    t5 = jnp.zeros((3, W, ci, W, co), jnp.float32)
    for kw in range(3):
        band = (q == wc + kw - 1).astype(jnp.float32)     # out-of-range cols simply absent
        t5 = t5 + band[None, :, None, :, None] * w_hwio[:, kw][:, None, :, None, :]
    return t5.reshape(3, W * ci, W * co).astype(jnp.bfloat16)


def _row_conv_weights_upcol(w_hwio, w_lo):
    """Like _row_conv_weights, with the nearest-neighbor column x2 upsample folded in.

    The kernel plane holds column-LOW-RES rows (w_lo*Cin lanes); output width W = 2*w_lo.
    """
    _, _, ci, co = w_hwio.shape
    W = 2 * w_lo
    q = jnp.arange(w_lo)[:, None]
    wc = jnp.arange(W)[None, :]
    t5 = jnp.zeros((3, w_lo, ci, W, co), jnp.float32)
    for kw in range(3):
        c = wc + kw - 1                                   # up-res input column
        band = ((q == c // 2) & (c >= 0) & (c < W)).astype(jnp.float32)
        t5 = t5 + band[None, :, None, :, None] * w_hwio[:, kw][:, None, :, None, :]
    return t5.reshape(3, w_lo * ci, W * co).astype(jnp.bfloat16)


def _pack_affine(p, W, act_then_bn):
    """Pack per-channel (bias, scale, shift), tiled along W -> (3, W*Cout) f32.

    bn_then_act: y = leaky(conv*scale + (b*scale + shift))   (bias folded, row0 unused)
    act_then_bn: y = leaky(conv + b) * scale + shift
    """
    if act_then_bn:
        bias, scale, shift = p["b"], p["scale"], p["shift"]
    else:
        bias = jnp.zeros_like(p["b"])
        scale = p["scale"]
        shift = p["b"] * p["scale"] + p["shift"]
    return jnp.stack(
        [jnp.tile(bias, W), jnp.tile(scale, W), jnp.tile(shift, W)], axis=0
    ).astype(jnp.float32)


def pack_recurrent_block_params(params, width, *, downsample=False, upsample=False,
                                bottleneck=False):
    """Pack raw conv+BN params into MXU-ready arrays.  Call once, outside jit."""
    if downsample or bottleneck:
        W = width
        cout = params["l1"]["w"].shape[-1]
        w2a = params["l2a"]["w"]
        return dict(
            t1=_row_conv_weights(params["l1"]["w"], W),
            # merged concat(out1, hidden) conv: K rows [0, W*Cout) act on the out1 lanes,
            # rows [W*Cout, 2*W*Cout) on the hidden lanes (matches torch.cat channel order).
            t2a=jnp.concatenate(
                [_row_conv_weights(w2a[:, :, :cout, :], W),
                 _row_conv_weights(w2a[:, :, cout:, :], W)], axis=1),
            t2b=_row_conv_weights(params["l2b"]["w"], W),
            p1=_pack_affine(params["l1"], W, act_then_bn=False),
            p2a=_pack_affine(params["l2a"], W, act_then_bn=bool(downsample)),
            p2b=_pack_affine(params["l2b"], W, act_then_bn=False),
        )
    if upsample:
        w_lo = width                       # low-res input width
        W = 2 * w_lo
        return dict(
            t1=_row_conv_weights_upcol(params["l1a"]["w"], w_lo),
            t2=_row_conv_weights(params["l1b"]["w"], W),
            p1=_pack_affine(params["l1a"], W, act_then_bn=False),
            p2=_pack_affine(params["l1b"], W, act_then_bn=False),
        )
    raise ValueError("one of downsample/upsample/bottleneck must be True")


# ----------------------------------------------------------------------------
# In-kernel helpers
# ----------------------------------------------------------------------------
def _rowconv3(plane_ref, t_ref, m):
    """3x3 conv on a batch-stacked, row-padded bf16 plane: 3 accumulated MXU matmuls."""
    acc = jnp.dot(plane_ref[0:m, :], t_ref[0], preferred_element_type=jnp.float32)
    acc = acc + jnp.dot(plane_ref[1:m + 1, :], t_ref[1], preferred_element_type=jnp.float32)
    acc = acc + jnp.dot(plane_ref[2:m + 2, :], t_ref[2], preferred_element_type=jnp.float32)
    return acc                                            # (m, W*Cout) f32


def _affine_act(acc, p_ref, act_then_bn):
    scale = p_ref[1:2, :]
    shift = p_ref[2:3, :]
    if act_then_bn:
        acc = acc + p_ref[0:1, :]
        acc = jnp.where(acc > 0, acc, LEAKY_SLOPE * acc)
        return acc * scale + shift
    acc = acc * scale + shift
    return jnp.where(acc > 0, acc, LEAKY_SLOPE * acc)


# ----------------------------------------------------------------------------
# Fused downsample / bottleneck branch kernel
# ----------------------------------------------------------------------------
def _make_down_bottleneck_kernel(H, W, cout, bs, l2a_act_then_bn):
    hp = H + _PAD
    m = bs * hp - 2                        # matmul M (incl. a few discarded halo rows)
    wco = W * cout

    def kernel(x_ref, hid_ref, t1_ref, t2a_ref, t2b_ref,
               p1_ref, p2a_ref, p2b_ref, out_ref, xpl, catpl, hpl):
        # Zero the planes once per pallas_call; only the halo/dead rows rely on it,
        # interiors are fully overwritten every grid step.
        @pl.when(pl.program_id(0) == 0)
        def _():
            xpl[...] = jnp.zeros_like(xpl)
            catpl[...] = jnp.zeros_like(catpl)
            hpl[...] = jnp.zeros_like(hpl)

        # Fill the input plane and the hidden half of the concat plane (single bf16 cast,
        # lane-aligned, whole packed-row-pair stores).
        for b in range(bs):
            base = b * hp
            xpl[base + _OFS:base + _OFS + H, :] = x_ref[b].astype(xpl.dtype)
            catpl[base + _OFS:base + _OFS + H, wco:2 * wco] = hid_ref[b].astype(catpl.dtype)

        # layer1: Conv -> BN -> LeakyReLU; result fills the out1 half of the concat plane.
        o1 = _affine_act(_rowconv3(xpl, t1_ref, m), p1_ref, act_then_bn=False)
        for b in range(bs):
            base = b * hp
            catpl[base + _OFS:base + _OFS + H, 0:wco] = (
                o1[base + _OFS - 1:base + _OFS - 1 + H].astype(catpl.dtype))

        # layer2 conv A on concat(out1, hidden): one merged K = 2*W*Cout matmul per kh tap.
        h2 = _affine_act(_rowconv3(catpl, t2a_ref, m), p2a_ref,
                         act_then_bn=l2a_act_then_bn)
        for b in range(bs):
            base = b * hp
            hpl[base + _OFS:base + _OFS + H, :] = (
                h2[base + _OFS - 1:base + _OFS - 1 + H].astype(hpl.dtype))

        # layer2 conv B: Conv -> BN -> LeakyReLU -> lane-dense bf16 output.
        y = _affine_act(_rowconv3(hpl, t2b_ref, m), p2b_ref, act_then_bn=False)
        for b in range(bs):
            base = b * hp
            out_ref[b] = y[base + _OFS - 1:base + _OFS - 1 + H].astype(out_ref.dtype)

    return kernel


def _fused_down_bottleneck(pk, x, hidden, *, l2a_act_then_bn, batch_shards=1):
    B, H, W, cin = x.shape
    cout = hidden.shape[-1]
    G = batch_shards
    assert B % G == 0, "batch_shards must divide the batch"
    bs = B // G
    hp = H + _PAD
    wco = W * cout

    x2 = x.reshape(B, H, W * cin)           # layout-preserving row-flatten
    hid2 = hidden.reshape(B, H, wco)

    kernel = _make_down_bottleneck_kernel(H, W, cout, bs, l2a_act_then_bn)
    out = pl.pallas_call(
        kernel,
        out_shape=jax.ShapeDtypeStruct((B, H, wco), jnp.bfloat16),
        grid_spec=pltpu.PrefetchScalarGridSpec(
            num_scalar_prefetch=0,
            grid=(G,),
            in_specs=[
                pl.BlockSpec((bs, H, W * cin), lambda g: (g, 0, 0)),
                pl.BlockSpec((bs, H, wco), lambda g: (g, 0, 0)),
                pl.BlockSpec((3, W * cin, wco), lambda g: (0, 0, 0)),
                pl.BlockSpec((3, 2 * wco, wco), lambda g: (0, 0, 0)),
                pl.BlockSpec((3, wco, wco), lambda g: (0, 0, 0)),
                pl.BlockSpec((3, wco), lambda g: (0, 0)),
                pl.BlockSpec((3, wco), lambda g: (0, 0)),
                pl.BlockSpec((3, wco), lambda g: (0, 0)),
            ],
            out_specs=pl.BlockSpec((bs, H, wco), lambda g: (g, 0, 0)),
            scratch_shapes=[
                pltpu.VMEM((bs * hp, W * cin), jnp.bfloat16),   # padded x plane
                pltpu.VMEM((bs * hp, 2 * wco), jnp.bfloat16),   # padded concat(out1,hidden)
                pltpu.VMEM((bs * hp, wco), jnp.bfloat16),       # padded h plane
            ],
        ),
        compiler_params=pltpu.CompilerParams(
            # Batch-shard axis: set batch_shards=2 on v7x (2 TensorCores) for larger B.
            dimension_semantics=("parallel",),
        ),
    )(x2, hid2, pk["t1"], pk["t2a"], pk["t2b"], pk["p1"], pk["p2a"], pk["p2b"])
    return out.reshape(B, H, W, cout)


# ----------------------------------------------------------------------------
# Fused upsample branch kernel
# ----------------------------------------------------------------------------
def _make_up_kernel(H, bs):
    hp = H + _PAD
    m = bs * hp - 2

    def kernel(x_ref, t1_ref, t2_ref, p1_ref, p2_ref, out_ref, xpl, hpl):
        @pl.when(pl.program_id(0) == 0)
        def _():
            xpl[...] = jnp.zeros_like(xpl)
            hpl[...] = jnp.zeros_like(hpl)

        for b in range(bs):
            base = b * hp
            xpl[base + _OFS:base + _OFS + H, :] = x_ref[b].astype(xpl.dtype)

        o1 = _affine_act(_rowconv3(xpl, t1_ref, m), p1_ref, act_then_bn=False)
        for b in range(bs):
            base = b * hp
            hpl[base + _OFS:base + _OFS + H, :] = (
                o1[base + _OFS - 1:base + _OFS - 1 + H].astype(hpl.dtype))

        y = _affine_act(_rowconv3(hpl, t2_ref, m), p2_ref, act_then_bn=False)
        for b in range(bs):
            base = b * hp
            out_ref[b] = y[base + _OFS - 1:base + _OFS - 1 + H].astype(out_ref.dtype)

    return kernel


def _fused_upsample(pk, x, *, batch_shards=1):
    B, h_lo, w_lo, cu = x.shape
    H, W = 2 * h_lo, 2 * w_lo
    wco = pk["t2"].shape[-1]
    cout = wco // W
    G = batch_shards
    assert B % G == 0
    bs = B // G
    hp = H + _PAD

    # Column x2 repeat (and column padding) are folded into pk["t1"]; only the row x2
    # repeat stays as wrapper glue, on the column-low-res input (2x, not 4x, expansion).
    # TODO(synk): fold the row x2 repeat into the kernel plane fill (strided sublane stores).
    x2 = jnp.repeat(x, 2, axis=1).reshape(B, H, w_lo * cu)

    kernel = _make_up_kernel(H, bs)
    out = pl.pallas_call(
        kernel,
        out_shape=jax.ShapeDtypeStruct((B, H, wco), jnp.bfloat16),
        grid_spec=pltpu.PrefetchScalarGridSpec(
            num_scalar_prefetch=0,
            grid=(G,),
            in_specs=[
                pl.BlockSpec((bs, H, w_lo * cu), lambda g: (g, 0, 0)),
                pl.BlockSpec((3, w_lo * cu, wco), lambda g: (0, 0, 0)),
                pl.BlockSpec((3, wco, wco), lambda g: (0, 0, 0)),
                pl.BlockSpec((3, wco), lambda g: (0, 0)),
                pl.BlockSpec((3, wco), lambda g: (0, 0)),
            ],
            out_specs=pl.BlockSpec((bs, H, wco), lambda g: (g, 0, 0)),
            scratch_shapes=[
                pltpu.VMEM((bs * hp, w_lo * cu), jnp.bfloat16),   # row-upsampled x plane
                pltpu.VMEM((bs * hp, wco), jnp.bfloat16),         # padded h plane
            ],
        ),
        compiler_params=pltpu.CompilerParams(dimension_semantics=("parallel",)),
    )(x2, pk["t1"], pk["t2"], pk["p1"], pk["p2"])
    return out.reshape(B, H, W, cout)


# ----------------------------------------------------------------------------
# Deterministic parameter construction (fresh-init synthetic weights)
# ----------------------------------------------------------------------------
def make_conv_bn_params(key, cin, cout):
    kw_, kb_, kg_, kbeta_, km_, kv_ = jax.random.split(key, 6)
    w = jax.random.normal(kw_, (3, 3, cin, cout), jnp.float32) * 0.1
    b = jax.random.normal(kb_, (cout,), jnp.float32) * 0.1
    gamma = jax.random.uniform(kg_, (cout,), jnp.float32, 0.5, 1.5)
    beta = jax.random.normal(kbeta_, (cout,), jnp.float32) * 0.1
    running_mean = jax.random.normal(km_, (cout,), jnp.float32) * 0.1
    running_var = jax.random.uniform(kv_, (cout,), jnp.float32, 0.5, 1.5)
    scale = gamma / jnp.sqrt(running_var + BN_EPS)
    shift = beta - running_mean * scale
    return dict(w=w, b=b, scale=scale, shift=shift)


def make_recurrent_block_params(key, in_channel, out_channel,
                                downsample=False, upsample=False, bottleneck=False):
    keys = jax.random.split(key, 4)
    params = {}
    if downsample or bottleneck:
        params["l1"] = make_conv_bn_params(keys[0], in_channel, out_channel)
        params["l2a"] = make_conv_bn_params(keys[1], 2 * out_channel, out_channel)
        params["l2b"] = make_conv_bn_params(keys[2], out_channel, out_channel)
    elif upsample:
        params["l1a"] = make_conv_bn_params(keys[0], 2 * in_channel, out_channel)
        params["l1b"] = make_conv_bn_params(keys[1], out_channel, out_channel)
    return params


# ----------------------------------------------------------------------------
# RecurrentBlock forward (NHWC); packed_params from pack_recurrent_block_params
# ----------------------------------------------------------------------------
def recurrent_block_forward(packed_params, x, hidden=None, *, downsample=False,
                            upsample=False, bottleneck=False, batch_shards=1):
    if downsample or bottleneck:
        # downsample: layer2 = Conv -> LeakyReLU -> BN -> Conv -> BN -> LeakyReLU
        # bottleneck: layer2 = Conv -> BN -> LeakyReLU -> Conv -> BN -> LeakyReLU
        out = _fused_down_bottleneck(packed_params, x, hidden,
                                     l2a_act_then_bn=bool(downsample),
                                     batch_shards=batch_shards)
        return out, out                        # (out2, new hidden)
    if upsample:
        return _fused_upsample(packed_params, x, batch_shards=batch_shards), None
    raise ValueError("one of downsample/upsample/bottleneck must be True")


# ----------------------------------------------------------------------------
# Pure-JAX references (lax.conv) for correctness checks
# ----------------------------------------------------------------------------
def _ref_conv(x, p, order):
    y = jax.lax.conv_general_dilated(
        x, p["w"], window_strides=(1, 1), padding="SAME",
        dimension_numbers=("NHWC", "HWIO", "NHWC"))
    y = y + p["b"]
    if order == "bn_then_act":
        y = y * p["scale"] + p["shift"]
        y = jnp.where(y > 0, y, LEAKY_SLOPE * y)
    else:
        y = jnp.where(y > 0, y, LEAKY_SLOPE * y)
        y = y * p["scale"] + p["shift"]
    return y


def _ref_down_bottleneck(params, x, hidden, l2a_order):
    out1 = _ref_conv(x, params["l1"], "bn_then_act")
    cat = jnp.concatenate([out1, hidden], axis=-1)
    h = _ref_conv(cat, params["l2a"], l2a_order)
    return _ref_conv(h, params["l2b"], "bn_then_act")


def _ref_upsample(params, x):
    xup = jnp.repeat(jnp.repeat(x, 2, axis=1), 2, axis=2)
    y = _ref_conv(xup, params["l1a"], "bn_then_act")
    return _ref_conv(y, params["l1b"], "bn_then_act")


def _check(name, out, ref, atol=5e-2, rtol=2e-2):
    # bf16 matmul operands + bf16 outputs vs an f32 lax.conv reference -> atol + rtol band.
    out = jnp.asarray(out, jnp.float32)
    excess = jnp.max(jnp.abs(out - ref) - (atol + rtol * jnp.abs(ref)))
    assert float(excess) <= 0.0, f"{name} mismatch vs reference (excess {float(excess):.4f})"


if __name__ == "__main__":
    B, in_channel, out_channel, H, W = 2, 4, 8, 16, 16

    key = jax.random.PRNGKey(0)
    kx, kp, kxu, kpu, kpb = jax.random.split(key, 5)

    # PyTorch-equivalent input is NCHW (2, 4, 16, 16); kernels work in NHWC.
    x_nchw = jax.random.normal(kx, (B, in_channel, H, W), jnp.float32)
    x = jnp.transpose(x_nchw, (0, 2, 3, 1))
    hidden0 = jnp.zeros((B, H, W, out_channel), jnp.float32)      # init_hidden(X, 1)

    # ---- downsample branch ----
    params_d = make_recurrent_block_params(kp, in_channel, out_channel, downsample=True)
    packed_d = pack_recurrent_block_params(params_d, W, downsample=True)   # packed ONCE
    fwd_d = jax.jit(functools.partial(recurrent_block_forward, downsample=True))
    out_d, hid_d = fwd_d(packed_d, x, hidden0)
    out_d = jax.block_until_ready(out_d)
    assert out_d.shape == (B, H, W, out_channel)
    ref_d = _ref_down_bottleneck(params_d, x, hidden0, "act_then_bn")
    _check("downsample", out_d, ref_d)

    # ---- recurrent second step: NONZERO hidden exercises the hidden half of the merged
    # layer-2a conv (w2a channel split [:Cout] -> out1, [Cout:] -> hidden) ----
    hid1 = hid_d.astype(jnp.float32)
    out_d2, _ = fwd_d(packed_d, x, hid1)
    out_d2 = jax.block_until_ready(out_d2)
    ref_d2 = _ref_down_bottleneck(params_d, x, hid1, "act_then_bn")
    _check("downsample-step2", out_d2, ref_d2)

    # ---- bottleneck branch ----
    params_b = make_recurrent_block_params(kpb, in_channel, out_channel, bottleneck=True)
    packed_b = pack_recurrent_block_params(params_b, W, bottleneck=True)
    fwd_b = jax.jit(functools.partial(recurrent_block_forward, bottleneck=True))
    out_b, _ = fwd_b(packed_b, x, hidden0)
    out_b = jax.block_until_ready(out_b)
    ref_b = _ref_down_bottleneck(params_b, x, hidden0, "bn_then_act")
    _check("bottleneck", out_b, ref_b)

    # ---- upsample branch (low-res NHWC input with 2*in_channel channels) ----
    xu_nchw = jax.random.normal(kxu, (B, 2 * in_channel, H // 2, W // 2), jnp.float32)
    xu = jnp.transpose(xu_nchw, (0, 2, 3, 1))
    params_u = make_recurrent_block_params(kpu, in_channel, out_channel, upsample=True)
    packed_u = pack_recurrent_block_params(params_u, W // 2, upsample=True)
    fwd_u = jax.jit(functools.partial(recurrent_block_forward, upsample=True))
    out_u, _ = fwd_u(packed_u, xu)
    out_u = jax.block_until_ready(out_u)
    assert out_u.shape == (B, H, W, out_channel)
    ref_u = _ref_upsample(params_u, xu)
    _check("upsample", out_u, ref_u)

    print("KERNEL_OK")
</pallas_src>

<mosaic_0001>
module attributes {stable_mosaic.version = 11 : i64} {
  func.func @kernel(%arg0: i32, %arg1: memref<2x16x64xf32, #tpu.memory_space<vmem>>, %arg2: memref<2x16x128xf32, #tpu.memory_space<vmem>>, %arg3: memref<3x64x128xbf16, #tpu.memory_space<vmem>>, %arg4: memref<3x256x128xbf16, #tpu.memory_space<vmem>>, %arg5: memref<3x128x128xbf16, #tpu.memory_space<vmem>>, %arg6: memref<3x128xf32, #tpu.memory_space<vmem>>, %arg7: memref<3x128xf32, #tpu.memory_space<vmem>>, %arg8: memref<3x128xf32, #tpu.memory_space<vmem>>, %arg9: memref<2x16x128xbf16, #tpu.memory_space<vmem>>, %arg10: memref<40x64xbf16, #tpu.memory_space<vmem>>, %arg11: memref<40x256xbf16, #tpu.memory_space<vmem>>, %arg12: memref<40x128xbf16, #tpu.memory_space<vmem>>) attributes {dimension_semantics = [#tpu.dimension_semantics<parallel>], iteration_bounds = array<i64: 1>, scalar_prefetch = 0 : i64, scratch_operands = 3 : i64, tpu.core_type = #tpu.core_type<tc>, window_params = [{transform_indices = @transform_0, window_bounds = array<i64: 2, 16, 64>}, {transform_indices = @transform_1, window_bounds = array<i64: 2, 16, 128>}, {pipeline_mode = #tpu.pipeline_mode<synchronous>, transform_indices = @transform_2, window_bounds = array<i64: 3, 64, 128>}, {pipeline_mode = #tpu.pipeline_mode<synchronous>, transform_indices = @transform_3, window_bounds = array<i64: 3, 256, 128>}, {pipeline_mode = #tpu.pipeline_mode<synchronous>, transform_indices = @transform_4, window_bounds = array<i64: 3, 128, 128>}, {pipeline_mode = #tpu.pipeline_mode<synchronous>, transform_indices = @transform_5, window_bounds = array<i64: 3, 128>}, {pipeline_mode = #tpu.pipeline_mode<synchronous>, transform_indices = @transform_6, window_bounds = array<i64: 3, 128>}, {pipeline_mode = #tpu.pipeline_mode<synchronous>, transform_indices = @transform_7, window_bounds = array<i64: 3, 128>}, {transform_indices = @transform_8, window_bounds = array<i64: 2, 16, 128>}]} {
    %c0_i32 = arith.constant 0 : i32
    %0 = arith.cmpi eq, %arg0, %c0_i32 : i32
    %1 = arith.extui %0 : i1 to i32
    %c0_i32_0 = arith.constant 0 : i32
    %2 = arith.cmpi ne, %1, %c0_i32_0 : i32
    scf.if %2 {
      %cst_103 = arith.constant 0.000000e+00 : bf16
      %119 = vector.broadcast %cst_103 : bf16 to vector<40x64xbf16>
      %c0_104 = arith.constant 0 : index
      %c0_105 = arith.constant 0 : index
      %120 = vector.load %arg10[%c0_104, %c0_105] : memref<40x64xbf16, #tpu.memory_space<vmem>>, vector<40x64xbf16>
      tpu.vector_store %arg10[%c0_104, %c0_105], %119 {strides = array<i32>} : memref<40x64xbf16, #tpu.memory_space<vmem>>, vector<40x64xbf16>,
      %cst_106 = arith.constant 0.000000e+00 : bf16
      %121 = vector.broadcast %cst_106 : bf16 to vector<40x256xbf16>
      %c0_107 = arith.constant 0 : index
      %c0_108 = arith.constant 0 : index
      %122 = vector.load %arg11[%c0_107, %c0_108] : memref<40x256xbf16, #tpu.memory_space<vmem>>, vector<40x256xbf16>
      tpu.vector_store %arg11[%c0_107, %c0_108], %121 {strides = array<i32>} : memref<40x256xbf16, #tpu.memory_space<vmem>>, vector<40x256xbf16>,
      %cst_109 = arith.constant 0.000000e+00 : bf16
      %123 = vector.broadcast %cst_109 : bf16 to vector<40x128xbf16>
      %c0_110 = arith.constant 0 : index
      %c0_111 = arith.constant 0 : index
      %124 = vector.load %arg12[%c0_110, %c0_111] : memref<40x128xbf16, #tpu.memory_space<vmem>>, vector<40x128xbf16>
      tpu.vector_store %arg12[%c0_110, %c0_111], %123 {strides = array<i32>} : memref<40x128xbf16, #tpu.memory_space<vmem>>, vector<40x128xbf16>,
    } else {
    }
    %c0 = arith.constant 0 : index
    %c0_1 = arith.constant 0 : index
    %c0_2 = arith.constant 0 : index
    %3 = vector.load %arg1[%c0, %c0_1, %c0_2] : memref<2x16x64xf32, #tpu.memory_space<vmem>>, vector<1x16x64xf32>
    %4 = vector.shape_cast %3 : vector<1x16x64xf32> to vector<16x64xf32>
    %5 = arith.truncf %4 : vector<16x64xf32> to vector<16x64xbf16>
    %c2 = arith.constant 2 : index
    %c0_3 = arith.constant 0 : index
    %6 = vector.load %arg10[%c2, %c0_3] : memref<40x64xbf16, #tpu.memory_space<vmem>>, vector<16x64xbf16>
    tpu.vector_store %arg10[%c2, %c0_3], %5 {strides = array<i32>} : memref<40x64xbf16, #tpu.memory_space<vmem>>, vector<16x64xbf16>,
    %c0_4 = arith.constant 0 : index
    %c0_5 = arith.constant 0 : index
    %c0_6 = arith.constant 0 : index
    %7 = vector.load %arg2[%c0_4, %c0_5, %c0_6] : memref<2x16x128xf32, #tpu.memory_space<vmem>>, vector<1x16x128xf32>
    %8 = vector.shape_cast %7 : vector<1x16x128xf32> to vector<16x128xf32>
    %9 = arith.truncf %8 : vector<16x128xf32> to vector<16x128xbf16>
    %c2_7 = arith.constant 2 : index
    %c128 = arith.constant 128 : index
    %10 = vector.load %arg11[%c2_7, %c128] : memref<40x256xbf16, #tpu.memory_space<vmem>>, vector<16x128xbf16>
    tpu.vector_store %arg11[%c2_7, %c128], %9 {strides = array<i32>} : memref<40x256xbf16, #tpu.memory_space<vmem>>, vector<16x128xbf16>,
    %c1 = arith.constant 1 : index
    %c0_8 = arith.constant 0 : index
    %c0_9 = arith.constant 0 : index
    %11 = vector.load %arg1[%c1, %c0_8, %c0_9] : memref<2x16x64xf32, #tpu.memory_space<vmem>>, vector<1x16x64xf32>
    %12 = vector.shape_cast %11 : vector<1x16x64xf32> to vector<16x64xf32>
    %13 = arith.truncf %12 : vector<16x64xf32> to vector<16x64xbf16>
    %c22 = arith.constant 22 : index
    %c0_10 = arith.constant 0 : index
    %14 = vector.load %arg10[%c22, %c0_10] : memref<40x64xbf16, #tpu.memory_space<vmem>>, vector<16x64xbf16>
    tpu.vector_store %arg10[%c22, %c0_10], %13 {strides = array<i32>} : memref<40x64xbf16, #tpu.memory_space<vmem>>, vector<16x64xbf16>,
    %c1_11 = arith.constant 1 : index
    %c0_12 = arith.constant 0 : index
    %c0_13 = arith.constant 0 : index
    %15 = vector.load %arg2[%c1_11, %c0_12, %c0_13] : memref<2x16x128xf32, #tpu.memory_space<vmem>>, vector<1x16x128xf32>
    %16 = vector.shape_cast %15 : vector<1x16x128xf32> to vector<16x128xf32>
    %17 = arith.truncf %16 : vector<16x128xf32> to vector<16x128xbf16>
    %c22_14 = arith.constant 22 : index
    %c128_15 = arith.constant 128 : index
    %18 = vector.load %arg11[%c22_14, %c128_15] : memref<40x256xbf16, #tpu.memory_space<vmem>>, vector<16x128xbf16>
    tpu.vector_store %arg11[%c22_14, %c128_15], %17 {strides = array<i32>} : memref<40x256xbf16, #tpu.memory_space<vmem>>, vector<16x128xbf16>,
    %c0_16 = arith.constant 0 : index
    %c0_17 = arith.constant 0 : index
    %19 = vector.load %arg10[%c0_16, %c0_17] : memref<40x64xbf16, #tpu.memory_space<vmem>>, vector<38x64xbf16>
    %c0_18 = arith.constant 0 : index
    %c0_19 = arith.constant 0 : index
    %c0_20 = arith.constant 0 : index
    %20 = vector.load %arg3[%c0_18, %c0_19, %c0_20] : memref<3x64x128xbf16, #tpu.memory_space<vmem>>, vector<1x64x128xbf16>
    %21 = vector.shape_cast %20 : vector<1x64x128xbf16> to vector<64x128xbf16>
    %cst = arith.constant dense<0.000000e+00> : vector<38x128xf32>
    %22 = tpu.matmul %19, %21, %cst {dimension_numbers = #tpu.dot_dimension_numbers<[1], [0], [0], [1], [0, 0, 1, 1], [], []>} : vector<38x64xbf16>, vector<64x128xbf16>, vector<38x128xf32> -> vector<38x128xf32>
    %c1_21 = arith.constant 1 : index
    %c0_22 = arith.constant 0 : index
    %23 = vector.load %arg10[%c1_21, %c0_22] : memref<40x64xbf16, #tpu.memory_space<vmem>>, vector<38x64xbf16>
    %c1_23 = arith.constant 1 : index
    %c0_24 = arith.constant 0 : index
    %c0_25 = arith.constant 0 : index
    %24 = vector.load %arg3[%c1_23, %c0_24, %c0_25] : memref<3x64x128xbf16, #tpu.memory_space<vmem>>, vector<1x64x128xbf16>
    %25 = vector.shape_cast %24 : vector<1x64x128xbf16> to vector<64x128xbf16>
    %cst_26 = arith.constant dense<0.000000e+00> : vector<38x128xf32>
    %26 = tpu.matmul %23, %25, %cst_26 {dimension_numbers = #tpu.dot_dimension_numbers<[1], [0], [0], [1], [0, 0, 1, 1], [], []>} : vector<38x64xbf16>, vector<64x128xbf16>, vector<38x128xf32> -> vector<38x128xf32>
    %27 = arith.addf %22, %26 : vector<38x128xf32>
    %c2_27 = arith.constant 2 : index
    %c0_28 = arith.constant 0 : index
    %28 = vector.load %arg10[%c2_27, %c0_28] : memref<40x64xbf16, #tpu.memory_space<vmem>>, vector<38x64xbf16>
    %c2_29 = arith.constant 2 : index
    %c0_30 = arith.constant 0 : index
    %c0_31 = arith.constant 0 : index
    %29 = vector.load %arg3[%c2_29, %c0_30, %c0_31] : memref<3x64x128xbf16, #tpu.memory_space<vmem>>, vector<1x64x128xbf16>
    %30 = vector.shape_cast %29 : vector<1x64x128xbf16> to vector<64x128xbf16>
    %cst_32 = arith.constant dense<0.000000e+00> : vector<38x128xf32>
    %31 = tpu.matmul %28, %30, %cst_32 {dimension_numbers = #tpu.dot_dimension_numbers<[1], [0], [0], [1], [0, 0, 1, 1], [], []>} : vector<38x64xbf16>, vector<64x128xbf16>, vector<38x128xf32> -> vector<38x128xf32>
    %32 = arith.addf %27, %31 : vector<38x128xf32>
    %c1_33 = arith.constant 1 : index
    %c0_34 = arith.constant 0 : index
    %33 = vector.load %arg6[%c1_33, %c0_34] : memref<3x128xf32, #tpu.memory_space<vmem>>, vector<1x128xf32>
    %c2_35 = arith.constant 2 : index
    %c0_36 = arith.constant 0 : index
    %34 = vector.load %arg6[%c2_35, %c0_36] : memref<3x128xf32, #tpu.memory_space<vmem>>, vector<1x128xf32>
    %35 = vector.broadcast %33 : vector<1x128xf32> to vector<38x128xf32>
    %36 = arith.mulf %32, %35 : vector<38x128xf32>
    %37 = vector.broadcast %34 : vector<1x128xf32> to vector<38x128xf32>
    %38 = arith.addf %36, %37 : vector<38x128xf32>
    %cst_37 = arith.constant 0.000000e+00 : f32
    %39 = vector.broadcast %cst_37 : f32 to vector<38x128xf32>
    %40 = arith.cmpf ogt, %38, %39 : vector<38x128xf32>
    %cst_38 = arith.constant 1.000000e-01 : f32
    %41 = vector.broadcast %cst_38 : f32 to vector<38x128xf32>
    %42 = arith.mulf %41, %38 : vector<38x128xf32>
    %43 = arith.select %40, %38, %42 : vector<38x128xi1>, vector<38x128xf32>
    %44 = vector.extract_strided_slice %43 {offsets = [1, 0], sizes = [16, 128], strides = [1, 1]} : vector<38x128xf32> to vector<16x128xf32>
    %45 = arith.truncf %44 : vector<16x128xf32> to vector<16x128xbf16>
    %c2_39 = arith.constant 2 : index
    %c0_40 = arith.constant 0 : index
    %46 = vector.load %arg11[%c2_39, %c0_40] : memref<40x256xbf16, #tpu.memory_space<vmem>>, vector<16x128xbf16>
    tpu.vector_store %arg11[%c2_39, %c0_40], %45 {strides = array<i32>} : memref<40x256xbf16, #tpu.memory_space<vmem>>, vector<16x128xbf16>,
    %47 = vector.extract_strided_slice %43 {offsets = [21, 0], sizes = [16, 128], strides = [1, 1]} : vector<38x128xf32> to vector<16x128xf32>
    %48 = arith.truncf %47 : vector<16x128xf32> to vector<16x128xbf16>
    %c22_41 = arith.constant 22 : index
    %c0_42 = arith.constant 0 : index
    %49 = vector.load %arg11[%c22_41, %c0_42] : memref<40x256xbf16, #tpu.memory_space<vmem>>, vector<16x128xbf16>
    tpu.vector_store %arg11[%c22_41, %c0_42], %48 {strides = array<i32>} : memref<40x256xbf16, #tpu.memory_space<vmem>>, vector<16x128xbf16>,
    %c0_43 = arith.constant 0 : index
    %c0_44 = arith.constant 0 : index
    %50 = vector.load %arg11[%c0_43, %c0_44] : memref<40x256xbf16, #tpu.memory_space<vmem>>, vector<38x256xbf16>
    %c0_45 = arith.constant 0 : index
    %c0_46 = arith.constant 0 : index
    %c0_47 = arith.constant 0 : index
    %51 = vector.load %arg4[%c0_45, %c0_46, %c0_47] : memref<3x256x128xbf16, #tpu.memory_space<vmem>>, vector<1x256x128xbf16>
    %52 = vector.shape_cast %51 : vector<1x256x128xbf16> to vector<256x128xbf16>
    %cst_48 = arith.constant dense<0.000000e+00> : vector<38x128xf32>
    %53 = tpu.matmul %50, %52, %cst_48 {dimension_numbers = #tpu.dot_dimension_numbers<[1], [0], [0], [1], [0, 0, 1, 1], [], []>} : vector<38x256xbf16>, vector<256x128xbf16>, vector<38x128xf32> -> vector<38x128xf32>
    %c1_49 = arith.constant 1 : index
    %c0_50 = arith.constant 0 : index
    %54 = vector.load %arg11[%c1_49, %c0_50] : memref<40x256xbf16, #tpu.memory_space<vmem>>, vector<38x256xbf16>
    %c1_51 = arith.constant 1 : index
    %c0_52 = arith.constant 0 : index
    %c0_53 = arith.constant 0 : index
    %55 = vector.load %arg4[%c1_51, %c0_52, %c0_53] : memref<3x256x128xbf16, #tpu.memory_space<vmem>>, vector<1x256x128xbf16>
    %56 = vector.shape_cast %55 : vector<1x256x128xbf16> to vector<256x128xbf16>
    %cst_54 = arith.constant dense<0.000000e+00> : vector<38x128xf32>
    %57 = tpu.matmul %54, %56, %cst_54 {dimension_numbers = #tpu.dot_dimension_numbers<[1], [0], [0], [1], [0, 0, 1, 1], [], []>} : vector<38x256xbf16>, vector<256x128xbf16>, vector<38x128xf32> -> vector<38x128xf32>
    %58 = arith.addf %53, %57 : vector<38x128xf32>
    %c2_55 = arith.constant 2 : index
    %c0_56 = arith.constant 0 : index
    %59 = vector.load %arg11[%c2_55, %c0_56] : memref<40x256xbf16, #tpu.memory_space<vmem>>, vector<38x256xbf16>
    %c2_57 = arith.constant 2 : index
    %c0_58 = arith.constant 0 : index
    %c0_59 = arith.constant 0 : index
    %60 = vector.load %arg4[%c2_57, %c0_58, %c0_59] : memref<3x256x128xbf16, #tpu.memory_space<vmem>>, vector<1x256x128xbf16>
    %61 = vector.shape_cast %60 : vector<1x256x128xbf16> to vector<256x128xbf16>
    %cst_60 = arith.constant dense<0.000000e+00> : vector<38x128xf32>
    %62 = tpu.matmul %59, %61, %cst_60 {dimension_numbers = #tpu.dot_dimension_numbers<[1], [0], [0], [1], [0, 0, 1, 1], [], []>} : vector<38x256xbf16>, vector<256x128xbf16>, vector<38x128xf32> -> vector<38x128xf32>
    %63 = arith.addf %58, %62 : vector<38x128xf32>
    %c1_61 = arith.constant 1 : index
    %c0_62 = arith.constant 0 : index
    %64 = vector.load %arg7[%c1_61, %c0_62] : memref<3x128xf32, #tpu.memory_space<vmem>>, vector<1x128xf32>
    %c2_63 = arith.constant 2 : index
    %c0_64 = arith.constant 0 : index
    %65 = vector.load %arg7[%c2_63, %c0_64] : memref<3x128xf32, #tpu.memory_space<vmem>>, vector<1x128xf32>
    %c0_65 = arith.constant 0 : index
    %c0_66 = arith.constant 0 : index
    %66 = vector.load %arg7[%c0_65, %c0_66] : memref<3x128xf32, #tpu.memory_space<vmem>>, vector<1x128xf32>
    %67 = vector.broadcast %66 : vector<1x128xf32> to vector<38x128xf32>
    %68 = arith.addf %63, %67 : vector<38x128xf32>
    %cst_67 = arith.constant 0.000000e+00 : f32
    %69 = vector.broadcast %cst_67 : f32 to vector<38x128xf32>
    %70 = arith.cmpf ogt, %68, %69 : vector<38x128xf32>
    %cst_68 = arith.constant 1.000000e-01 : f32
    %71 = vector.broadcast %cst_68 : f32 to vector<38x128xf32>
    %72 = arith.mulf %71, %68 : vector<38x128xf32>
    %73 = arith.select %70, %68, %72 : vector<38x128xi1>, vector<38x128xf32>
    %74 = vector.broadcast %64 : vector<1x128xf32> to vector<38x128xf32>
    %75 = arith.mulf %73, %74 : vector<38x128xf32>
    %76 = vector.broadcast %65 : vector<1x128xf32> to vector<38x128xf32>
    %77 = arith.addf %75, %76 : vector<38x128xf32>
    %78 = vector.extract_strided_slice %77 {offsets = [1, 0], sizes = [16, 128], strides = [1, 1]} : vector<38x128xf32> to vector<16x128xf32>
    %79 = arith.truncf %78 : vector<16x128xf32> to vector<16x128xbf16>
    %c2_69 = arith.constant 2 : index
    %c0_70 = arith.constant 0 : index
    %80 = vector.load %arg12[%c2_69, %c0_70] : memref<40x128xbf16, #tpu.memory_space<vmem>>, vector<16x128xbf16>
    tpu.vector_store %arg12[%c2_69, %c0_70], %79 {strides = array<i32>} : memref<40x128xbf16, #tpu.memory_space<vmem>>, vector<16x128xbf16>,
    %81 = vector.extract_strided_slice %77 {offsets = [21, 0], sizes = [16, 128], strides = [1, 1]} : vector<38x128xf32> to vector<16x128xf32>
    %82 = arith.truncf %81 : vector<16x128xf32> to vector<16x128xbf16>
    %c22_71 = arith.constant 22 : index
    %c0_72 = arith.constant 0 : index
    %83 = vector.load %arg12[%c22_71, %c0_72] : memref<40x128xbf16, #tpu.memory_space<vmem>>, vector<16x128xbf16>
    tpu.vector_store %arg12[%c22_71, %c0_72], %82 {strides = array<i32>} : memref<40x128xbf16, #tpu.memory_space<vmem>>, vector<16x128xbf16>,
    %c0_73 = arith.constant 0 : index
    %c0_74 = arith.constant 0 : index
    %84 = vector.load %arg12[%c0_73, %c0_74] : memref<40x128xbf16, #tpu.memory_space<vmem>>, vector<38x128xbf16>
    %c0_75 = arith.constant 0 : index
    %c0_76 = arith.constant 0 : index
    %c0_77 = arith.constant 0 : index
    %85 = vector.load %arg5[%c0_75, %c0_76, %c0_77] : memref<3x128x128xbf16, #tpu.memory_space<vmem>>, vector<1x128x128xbf16>
    %86 = vector.shape_cast %85 : vector<1x128x128xbf16> to vector<128x128xbf16>
    %cst_78 = arith.constant dense<0.000000e+00> : vector<38x128xf32>
    %87 = tpu.matmul %84, %86, %cst_78 {dimension_numbers = #tpu.dot_dimension_numbers<[1], [0], [0], [1], [0, 0, 1, 1], [], []>} : vector<38x128xbf16>, vector<128x128xbf16>, vector<38x128xf32> -> vector<38x128xf32>
    %c1_79 = arith.constant 1 : index
    %c0_80 = arith.constant 0 : index
    %88 = vector.load %arg12[%c1_79, %c0_80] : memref<40x128xbf16, #tpu.memory_space<vmem>>, vector<38x128xbf16>
    %c1_81 = arith.constant 1 : index
    %c0_82 = arith.constant 0 : index
    %c0_83 = arith.constant 0 : index
    %89 = vector.load %arg5[%c1_81, %c0_82, %c0_83] : memref<3x128x128xbf16, #tpu.memory_space<vmem>>, vector<1x128x128xbf16>
    %90 = vector.shape_cast %89 : vector<1x128x128xbf16> to vector<128x128xbf16>
    %cst_84 = arith.constant dense<0.000000e+00> : vector<38x128xf32>
    %91 = tpu.matmul %88, %90, %cst_84 {dimension_numbers = #tpu.dot_dimension_numbers<[1], [0], [0], [1], [0, 0, 1, 1], [], []>} : vector<38x128xbf16>, vector<128x128xbf16>, vector<38x128xf32> -> vector<38x128xf32>
    %92 = arith.addf %87, %91 : vector<38x128xf32>
    %c2_85 = arith.constant 2 : index
    %c0_86 = arith.constant 0 : index
    %93 = vector.load %arg12[%c2_85, %c0_86] : memref<40x128xbf16, #tpu.memory_space<vmem>>, vector<38x128xbf16>
    %c2_87 = arith.constant 2 : index
    %c0_88 = arith.constant 0 : index
    %c0_89 = arith.constant 0 : index
    %94 = vector.load %arg5[%c2_87, %c0_88, %c0_89] : memref<3x128x128xbf16, #tpu.memory_space<vmem>>, vector<1x128x128xbf16>
    %95 = vector.shape_cast %94 : vector<1x128x128xbf16> to vector<128x128xbf16>
    %cst_90 = arith.constant dense<0.000000e+00> : vector<38x128xf32>
    %96 = tpu.matmul %93, %95, %cst_90 {dimension_numbers = #tpu.dot_dimension_numbers<[1], [0], [0], [1], [0, 0, 1, 1], [], []>} : vector<38x128xbf16>, vector<128x128xbf16>, vector<38x128xf32> -> vector<38x128xf32>
    %97 = arith.addf %92, %96 : vector<38x128xf32>
    %c1_91 = arith.constant 1 : index
    %c0_92 = arith.constant 0 : index
    %98 = vector.load %arg8[%c1_91, %c0_92] : memref<3x128xf32, #tpu.memory_space<vmem>>, vector<1x128xf32>
    %c2_93 = arith.constant 2 : index
    %c0_94 = arith.constant 0 : index
    %99 = vector.load %arg8[%c2_93, %c0_94] : memref<3x128xf32, #tpu.memory_space<vmem>>, vector<1x128xf32>
    %100 = vector.broadcast %98 : vector<1x128xf32> to vector<38x128xf32>
    %101 = arith.mulf %97, %100 : vector<38x128xf32>
    %102 = vector.broadcast %99 : vector<1x128xf32> to vector<38x128xf32>
    %103 = arith.addf %101, %102 : vector<38x128xf32>
    %cst_95 = arith.constant 0.000000e+00 : f32
    %104 = vector.broadcast %cst_95 : f32 to vector<38x128xf32>
    %105 = arith.cmpf ogt, %103, %104 : vector<38x128xf32>
    %cst_96 = arith.constant 1.000000e-01 : f32
    %106 = vector.broadcast %cst_96 : f32 to vector<38x128xf32>
    %107 = arith.mulf %106, %103 : vector<38x128xf32>
    %108 = arith.select %105, %103, %107 : vector<38x128xi1>, vector<38x128xf32>
    %109 = vector.extract_strided_slice %108 {offsets = [1, 0], sizes = [16, 128], strides = [1, 1]} : vector<38x128xf32> to vector<16x128xf32>
    %110 = arith.truncf %109 : vector<16x128xf32> to vector<16x128xbf16>
    %c0_97 = arith.constant 0 : index
    %c0_98 = arith.constant 0 : index
    %c0_99 = arith.constant 0 : index
    %111 = vector.load %arg9[%c0_97, %c0_98, %c0_99] : memref<2x16x128xbf16, #tpu.memory_space<vmem>>, vector<1x16x128xbf16>
    %112 = vector.shape_cast %111 : vector<1x16x128xbf16> to vector<16x128xbf16>
    %113 = vector.shape_cast %110 : vector<16x128xbf16> to vector<1x16x128xbf16>
    tpu.vector_store %arg9[%c0_97, %c0_98, %c0_99], %113 {strides = array<i32>} : memref<2x16x128xbf16, #tpu.memory_space<vmem>>, vector<1x16x128xbf16>,
    %114 = vector.extract_strided_slice %108 {offsets = [21, 0], sizes = [16, 128], strides = [1, 1]} : vector<38x128xf32> to vector<16x128xf32>
    %115 = arith.truncf %114 : vector<16x128xf32> to vector<16x128xbf16>
    %c1_100 = arith.constant 1 : index
    %c0_101 = arith.constant 0 : index
    %c0_102 = arith.constant 0 : index
    %116 = vector.load %arg9[%c1_100, %c0_101, %c0_102] : memref<2x16x128xbf16, #tpu.memory_space<vmem>>, vector<1x16x128xbf16>
    %117 = vector.shape_cast %116 : vector<1x16x128xbf16> to vector<16x128xbf16>
    %118 = vector.shape_cast %115 : vector<16x128xbf16> to vector<1x16x128xbf16>
    tpu.vector_store %arg9[%c1_100, %c0_101, %c0_102], %118 {strides = array<i32>} : memref<2x16x128xbf16, #tpu.memory_space<vmem>>, vector<1x16x128xbf16>,
    return
  }
  func.func @transform_0(%arg0: i32) -> (i32, i32, i32) {
    %c0_i32 = arith.constant 0 : i32
    %c0_i32_0 = arith.constant 0 : i32
    %c0_i32_1 = arith.constant 0 : i32
    return %arg0, %c0_i32, %c0_i32_0 : i32, i32, i32
  }
  func.func @transform_1(%arg0: i32) -> (i32, i32, i32) {
    %c0_i32 = arith.constant 0 : i32
    %c0_i32_0 = arith.constant 0 : i32
    %c0_i32_1 = arith.constant 0 : i32
    return %arg0, %c0_i32, %c0_i32_0 : i32, i32, i32
  }
  func.func @transform_2(%arg0: i32) -> (i32, i32, i32) {
    %c0_i32 = arith.constant 0 : i32
    %c0_i32_0 = arith.constant 0 : i32
    %c0_i32_1 = arith.constant 0 : i32
    %c0_i32_2 = arith.constant 0 : i32
    return %c0_i32, %c0_i32_0, %c0_i32_1 : i32, i32, i32
  }
  func.func @transform_3(%arg0: i32) -> (i32, i32, i32) {
    %c0_i32 = arith.constant 0 : i32
    %c0_i32_0 = arith.constant 0 : i32
    %c0_i32_1 = arith.constant 0 : i32
    %c0_i32_2 = arith.constant 0 : i32
    return %c0_i32, %c0_i32_0, %c0_i32_1 : i32, i32, i32
  }
  func.func @transform_4(%arg0: i32) -> (i32, i32, i32) {
    %c0_i32 = arith.constant 0 : i32
    %c0_i32_0 = arith.constant 0 : i32
    %c0_i32_1 = arith.constant 0 : i32
    %c0_i32_2 = arith.constant 0 : i32
    return %c0_i32, %c0_i32_0, %c0_i32_1 : i32, i32, i32
  }
  func.func @transform_5(%arg0: i32) -> (i32, i32) {
    %c0_i32 = arith.constant 0 : i32
    %c0_i32_0 = arith.constant 0 : i32
    %c0_i32_1 = arith.constant 0 : i32
    return %c0_i32, %c0_i32_0 : i32, i32
  }
  func.func @transform_6(%arg0: i32) -> (i32, i32) {
    %c0_i32 = arith.constant 0 : i32
    %c0_i32_0 = arith.constant 0 : i32
    %c0_i32_1 = arith.constant 0 : i32
    return %c0_i32, %c0_i32_0 : i32, i32
  }
  func.func @transform_7(%arg0: i32) -> (i32, i32) {
    %c0_i32 = arith.constant 0 : i32
    %c0_i32_0 = arith.constant 0 : i32
    %c0_i32_1 = arith.constant 0 : i32
    return %c0_i32, %c0_i32_0 : i32, i32
  }
  func.func @transform_8(%arg0: i32) -> (i32, i32, i32) {
    %c0_i32 = arith.constant 0 : i32
    %c0_i32_0 = arith.constant 0 : i32
    %c0_i32_1 = arith.constant 0 : i32
    return %arg0, %c0_i32, %c0_i32_0 : i32, i32, i32
  }
}

</mosaic_0001>

<llo_original>
// kernel: recurrent_block_forward.1
$region0: #{recurrent_block_forward.1}
  #allocation0 [shape = 'u32[]', space=smem, size = 0x4, offset = 0x4, fixed_abs, tag = 'smem constant byte address 0x4 - core index']
  #allocation1 [shape = 'u32[72,128]{1,0:T(1,128)}', space=vmem, size = 0x9000, scoped, tag = 'internal scratch']
  #allocation2 [shape = 'bf16[40,64]{1,0:T(8,128)(2,1)}', space=vmem, size = 0x2800, scoped, tag = 'scratch operand']
  #allocation3 [shape = 'bf16[40,256]{1,0:T(8,128)(2,1)}', space=vmem, size = 0x5000, scoped, tag = 'scratch operand']
  #allocation4 [shape = 'bf16[40,128]{1,0:T(8,128)(2,1)}', space=vmem, size = 0x2800, scoped, tag = 'scratch operand']
  %s0 = inlined_call_operand.vmem [shape: f32[2,16,64], index: 0, kind: input, shape index: {}]
  %s1 = inlined_call_operand.vmem [shape: f32[2,16,128], index: 1, kind: input, shape index: {}]
  %s2 = inlined_call_operand.vmem [shape: bf16[3,64,128], index: 2, kind: input, shape index: {}]
  %s3 = inlined_call_operand.vmem [shape: bf16[3,256,128], index: 3, kind: input, shape index: {}]
  %s4 = inlined_call_operand.vmem [shape: bf16[3,128,128], index: 4, kind: input, shape index: {}]
  %s5 = inlined_call_operand.vmem [shape: f32[3,128], index: 5, kind: input, shape index: {}]
  %s6 = inlined_call_operand.vmem [shape: f32[3,128], index: 6, kind: input, shape index: {}]
  %s7 = inlined_call_operand.vmem [shape: f32[3,128], index: 7, kind: input, shape index: {}]
  %s8 = inlined_call_operand.vmem [shape: bf16[2,16,128], index: 8, kind: output, shape index: {}]
  %s9 = sld [smem:[#allocation0]]
  $region46: #{recurrent_block_forward.1} parent=0
    _
  %s11 = ssub.s32 1, %s9
  %s12 = scalar_select 0, %s11, %s9
  // Predicated region
  $region2: #{recurrent_block_forward.1} parent=0 // pred_check
    _
  $region3: #{recurrent_block_forward.1} parent=0 // pred_check_branch
    %14 = sbr.rel (0) target = $region5
  $region4: #{recurrent_block_forward.1} parent=0 // pred_region
    _
  $region5: #{recurrent_block_forward.1} parent=0 // pred_fallthru
    _
  // Predicated region
  $region6: #{recurrent_block_forward.1} parent=0 // pred_check
    _
  $region7: #{recurrent_block_forward.1} parent=0 // pred_check_branch
    %16 = sbr.rel (0) target = $region9
  $region8: #{recurrent_block_forward.1} parent=0 // pred_region
    _
  $region9: #{recurrent_block_forward.1} parent=0 // pred_fallthru
    _
  // Predicated region
  $region10: #{recurrent_block_forward.1} parent=0 // pred_check
    _
  $region11: #{recurrent_block_forward.1} parent=0 // pred_check_branch
    %18 = sbr.rel (0) target = $region13
  $region12: #{recurrent_block_forward.1} parent=0 // pred_region
    _
  $region13: #{recurrent_block_forward.1} parent=0 // pred_fallthru
    _
  // Predicated region
  $region14: #{recurrent_block_forward.1} parent=0 // pred_check
    _
  $region15: #{recurrent_block_forward.1} parent=0 // pred_check_branch
    %20 = sbr.rel (0) target = $region17
  $region16: #{recurrent_block_forward.1} parent=0 // pred_region
    _
  $region17: #{recurrent_block_forward.1} parent=0 // pred_fallthru
    _
  // Predicated region
  $region18: #{recurrent_block_forward.1} parent=0 // pred_check
    _
  $region19: #{recurrent_block_forward.1} parent=0 // pred_check_branch
    %22 = sbr.rel (0) target = $region21
  $region20: #{recurrent_block_forward.1} parent=0 // pred_region
    _
  $region21: #{recurrent_block_forward.1} parent=0 // pred_fallthru
    _
  // Predicated region
  $region22: #{recurrent_block_forward.1} parent=0 // pred_check
    _
  $region23: #{recurrent_block_forward.1} parent=0 // pred_check_branch
    %24 = sbr.rel (0) target = $region25
  $region24: #{recurrent_block_forward.1} parent=0 // pred_region
    _
  $region25: #{recurrent_block_forward.1} parent=0 // pred_fallthru
    _
  // Predicated region
  $region26: #{recurrent_block_forward.1} parent=0 // pred_check
    _
  $region27: #{recurrent_block_forward.1} parent=0 // pred_check_branch
    %26 = sbr.rel (0) target = $region29
  $region28: #{recurrent_block_forward.1} parent=0 // pred_region
    _
  $region29: #{recurrent_block_forward.1} parent=0 // pred_fallthru
    _
  // Predicated region
  $region30: #{recurrent_block_forward.1} parent=0 // pred_check
    _
  $region31: #{recurrent_block_forward.1} parent=0 // pred_check_branch
    %28 = sbr.rel (0) target = $region33
  $region32: #{recurrent_block_forward.1} parent=0 // pred_region
    _
  $region33: #{recurrent_block_forward.1} parent=0 // pred_fallthru
    _
  %p30 = scmp.eq.s32.totalorder 0, 0
  // Predicated region
  $region34: #{recurrent_block_forward.1} parent=0 // pred_check
    %p31 = pneg %p30
  $region35: #{recurrent_block_forward.1} parent=0 // pred_check_branch
    %33 = sbr.rel (%p31) target = $region37
  $region36: #{recurrent_block_forward.1} parent=0 // pred_region
    %vm34 = vcmask 519168
    %35 = vst.msk [vmem:[#allocation2] sm:$0xf] %vm34, 0
    %36 = vst.msk [vmem:[#allocation2 + $0x4] sm:$0xf] %vm34, 0
    %37 = vst.msk [vmem:[#allocation2 + $0x8] sm:$0xf] %vm34, 0
    %38 = vst.msk [vmem:[#allocation2 + $0xc] sm:$0xf] %vm34, 0
    %39 = vst.msk [vmem:[#allocation2 + $0x10] sm:$0xf] %vm34, 0
    %40 = vst [vmem:[#allocation3] sm:$0xff] 0
    %41 = vst [vmem:[#allocation3 + $0x8] sm:$0xff] 0
    %42 = vst [vmem:[#allocation3 + $0x10] sm:$0xff] 0
    %43 = vst [vmem:[#allocation3 + $0x18] sm:$0xff] 0
    %44 = vst [vmem:[#allocation3 + $0x20] sm:$0xff] 0
    %45 = vst [vmem:[#allocation4] sm:$0xf] 0
    %46 = vst [vmem:[#allocation4 + $0x4] sm:$0xf] 0
    %47 = vst [vmem:[#allocation4 + $0x8] sm:$0xf] 0
    %48 = vst [vmem:[#allocation4 + $0xc] sm:$0xf] 0
    %49 = vst [vmem:[#allocation4 + $0x10] sm:$0xf] 0
  $region37: #{recurrent_block_forward.1} parent=0 // pred_fallthru
    _
  %v50 = vld [vmem:[%s0] sm:$0xff]
  %v51 = vld [vmem:[%s0 + $0x8] sm:$0xff]
  %v52 = vpack.c.bf16 %v50, %v50
  %v53 = vpack.c.bf16 %v51, %v51
  %vm56 = vcmask 1040384
  %vm57 = vcmask 1044484
  %vm58 = vmor %vm56, %vm57
  %v59 = vrot.slane %v52, 7
  %v60 = vrot.slane %v59, 4
  %v61 = vrot.slane %v53, 7
  %v62 = vsel %vm58, %v60, %v61
  %v63 = vrot.slane %v61, 4
  %vm67 = vcmask 519169
  %68 = vst.msk [vmem:[#allocation2] sm:$0xe] %vm67, %v59
  %vm69 = vcmask 519168
  %70 = vst.msk [vmem:[#allocation2 + $0x4] sm:$0xf] %vm69, %v62
  %vm71 = vcmask 516096
  %72 = vst.msk [vmem:[#allocation2 + $0x8] sm:$0x1] %vm71, %v63
  %v73 = vld [vmem:[%s1] sm:$0xff]
  %v74 = vld [vmem:[%s1 + $0x8] sm:$0xff]
  %v75 = vpack.c.bf16 %v73, %v73
  %v76 = vpack.c.bf16 %v74, %v74
  %v79 = vrot.slane %v75, 7
  %v80 = vrot.slane %v79, 4
  %v81 = vrot.slane %v76, 7
  %v82 = vsel %vm58, %v80, %v81
  %v83 = vrot.slane %v81, 4
  %87 = vst [vmem:[#allocation3 + $0x4] sm:$0xe] %v79
  %88 = vst [vmem:[#allocation3 + $0xc] sm:$0xf] %v82
  %89 = vst [vmem:[#allocation3 + $0x14] sm:$0x1] %v83
  %s90 = scalar_lea.vmem %s0, 16
  %v91 = vld [vmem:[%s90] sm:$0xff]
  %v92 = vld [vmem:[%s90 + $0x8] sm:$0xff]
  %v93 = vpack.c.bf16 %v91, %v91
  %v94 = vpack.c.bf16 %v92, %v92
  %vm97 = vcmask 1042432
  %vm98 = vcmask 1046532
  %vm99 = vmor %vm97, %vm98
  %v100 = vrot.slane %v93, 5
  %v101 = vrot.slane %v100, 4
  %v102 = vrot.slane %v94, 5
  %v103 = vsel %vm99, %v101, %v102
  %v104 = vrot.slane %v102, 4
  %vm108 = vcmask 519171
  %109 = vst.msk [vmem:[#allocation2 + $0x8] sm:$0x8] %vm108, %v100
  %110 = vst.msk [vmem:[#allocation2 + $0xc] sm:$0xf] %vm69, %v103
  %vm111 = vcmask 518144
  %112 = vst.msk [vmem:[#allocation2 + $0x10] sm:$0x7] %vm111, %v104
  %s113 = scalar_lea.vmem %s1, 16
  %v114 = vld [vmem:[%s113] sm:$0xff]
  %v115 = vld [vmem:[%s113 + $0x8] sm:$0xff]
  %v116 = vpack.c.bf16 %v114, %v114
  %v117 = vpack.c.bf16 %v115, %v115
  %v120 = vrot.slane %v116, 5
  %v121 = vrot.slane %v120, 4
  %v122 = vrot.slane %v117, 5
  %v123 = vsel %vm99, %v121, %v122
  %v124 = vrot.slane %v122, 4
  %128 = vst [vmem:[#allocation3 + $0x14] sm:$0x8] %v120
  %129 = vst [vmem:[#allocation3 + $0x1c] sm:$0xf] %v123
  %130 = vst [vmem:[#allocation3 + $0x24] sm:$0x7] %v124
  %v131 = vld [vmem:[#allocation2] sm:$0xf]
  %v132 = vld [vmem:[#allocation2 + $0x4] sm:$0xf]
  %v133 = vld [vmem:[#allocation2 + $0x8] sm:$0xf]
  %v134 = vld [vmem:[#allocation2 + $0xc] sm:$0xf]
  %v135 = vld [vmem:[#allocation2 + $0x10] sm:$0x7]
  %v136 = vld [vmem:[%s2] sm:$0xf]
  %v137 = vld [vmem:[%s2 + $0x4] sm:$0xf]
  %v138 = vld [vmem:[%s2 + $0x8] sm:$0xf]
  %v139 = vld [vmem:[%s2 + $0xc] sm:$0xf]
  %v140 = vld [vmem:[%s2 + $0x10] sm:$0xf]
  %v141 = vld [vmem:[%s2 + $0x14] sm:$0xf]
  %v142 = vld [vmem:[%s2 + $0x18] sm:$0xf]
  %v143 = vld [vmem:[%s2 + $0x1c] sm:$0xf]
  %v144 = vld [vmem:[#allocation2 + $0x10] sm:$0xf]
  %s145 = scalar_lea.vmem %s2, 32
  %v146 = vld [vmem:[%s145] sm:$0xf]
  %v147 = vld [vmem:[%s145 + $0x4] sm:$0xf]
  %v148 = vld [vmem:[%s145 + $0x8] sm:$0xf]
  %v149 = vld [vmem:[%s145 + $0xc] sm:$0xf]
  %v150 = vld [vmem:[%s145 + $0x10] sm:$0xf]
  %v151 = vld [vmem:[%s145 + $0x14] sm:$0xf]
  %v152 = vld [vmem:[%s145 + $0x18] sm:$0xf]
  %v153 = vld [vmem:[%s145 + $0x1c] sm:$0xf]
  %v159 = vunpack.c.l.b16 %v131
  %v160 = vunpack.c.l.b16 %v132
  %v161 = vunpack.c.l.b16 %v133
  %v162 = vunpack.c.l.b16 %v134
  %v163 = vunpack.c.l.b16 %v144
  %v164 = vpack.c.b16 %v160, %v159
  %v165 = vpack.c.b16 %v162, %v161
  %v166 = vpack.c.b16 %v163, %v163
  %vm167 = vsmask.f32 7424
  %v169 = vshrl.u32 %v164, 16
  %v171 = vshll.u32 %v164, 16
  %v173 = vrot.slane %v171, 1
  %v174 = vor.u32 %v169, %v173
  %v176 = vshll.u32 %v165, 16
  %v178 = vrot.slane %v176, 1
  %v179 = vsel %vm167, %v174, %v178
  %v180 = vshrl.u32 %v165, 16
  %v182 = vor.u32 %v180, %v178
  %v184 = vshll.u32 %v166, 16
  %v186 = vrot.slane %v184, 1
  %v187 = vsel %vm167, %v182, %v186
  %v188 = vshrl.u32 %v166, 16
  %v190 = vor.u32 %v188, %v186
  %v199 = vunpack.c.l.b16 %v146
  %v200 = vunpack.c.l.b16 %v147
  %v201 = vunpack.c.l.b16 %v148
  %v202 = vunpack.c.l.b16 %v149
  %v203 = vunpack.c.l.b16 %v150
  %v204 = vunpack.c.l.b16 %v151
  %v205 = vunpack.c.l.b16 %v152
  %v206 = vunpack.c.l.b16 %v153
  %v207 = vpack.c.b16 %v200, %v199
  %v208 = vpack.c.b16 %v202, %v201
  %v209 = vpack.c.b16 %v204, %v203
  %v210 = vpack.c.b16 %v206, %v205
  %vm215 = vcmask 523264
  %v217 = vsel %vm215, %v179, 0
  %v220 = vsel %vm215, %v187, 0
  %v223 = vsel %vm215, %v190, 0
  %225 = vmatpush.bf16.msra.mxu0 0
  %226 = vmatpush.bf16.msra.mxu0 0
  %227 = vmatpush.bf16.msra.mxu0 0
  %228 = vmatpush.bf16.msra.mxu0 0
  %229 = vmatpush.bf16.msra.mxu0 %v210
  %230 = vmatpush.bf16.msra.mxu0 %v209
  %231 = vmatpush.bf16.msra.mxu0 %v208
  %232 = vmatpush.bf16.msra.mxu0 %v207
  %233 = vmatmul.bf16.gmra.mxu0 %v217
  %v234 = vpop.f32.mrf.mxu0
  %v235 = vadd.f32 0.0, %v234
  %v236 = vpop.f32.mrf.mxu0
  %v237 = vadd.f32 0.0, %v236
  %238 = vmatmul.bf16.gmra.mxu0 %v220
  %v239 = vpop.f32.mrf.mxu0
  %v240 = vadd.f32 0.0, %v239
  %v241 = vpop.f32.mrf.mxu0
  %v242 = vadd.f32 0.0, %v241
  %243 = vmatmul.bf16.gmra.mxu0 %v223
  %v244 = vpop.f32.mrf.mxu0
  %v245 = vadd.f32 0.0, %v244
  %v246 = vpop.f32.mrf.mxu0
  %247 = vdwg.mxu0
  %v249 = vunpack.c.l.b16 %v135
  %v250 = vpack.c.b16 %v249, %v249
  %v259 = vunpack.c.l.b16 %v136
  %v260 = vunpack.c.l.b16 %v137
  %v261 = vunpack.c.l.b16 %v138
  %v262 = vunpack.c.l.b16 %v139
  %v263 = vunpack.c.l.b16 %v140
  %v264 = vunpack.c.l.b16 %v141
  %v265 = vunpack.c.l.b16 %v142
  %v266 = vunpack.c.l.b16 %v143
  %v267 = vpack.c.b16 %v260, %v259
  %v268 = vpack.c.b16 %v262, %v261
  %v269 = vpack.c.b16 %v264, %v263
  %v270 = vpack.c.b16 %v266, %v265
  %v275 = vsel %vm215, %v164, 0
  %v277 = vsel %vm215, %v165, 0
  %v280 = vsel %vm215, %v250, 0
  %282 = vmatpush.bf16.msra.mxu0 0
  %283 = vmatpush.bf16.msra.mxu0 0
  %284 = vmatpush.bf16.msra.mxu0 0
  %285 = vmatpush.bf16.msra.mxu0 0
  %286 = vmatpush.bf16.msra.mxu0 %v270
  %287 = vmatpush.bf16.msra.mxu0 %v269
  %288 = vmatpush.bf16.msra.mxu0 %v268
  %289 = vmatpush.bf16.msra.mxu0 %v267
  %290 = vmatmul.bf16.gmra.mxu0 %v275
  %v291 = vpop.f32.mrf.mxu0
  %v292 = vadd.f32 %v235, %v291
  %v293 = vpop.f32.mrf.mxu0
  %v294 = vadd.f32 %v237, %v293
  %295 = vmatmul.bf16.gmra.mxu0 %v277
  %v296 = vpop.f32.mrf.mxu0
  %v297 = vadd.f32 %v240, %v296
  %v298 = vpop.f32.mrf.mxu0
  %v299 = vadd.f32 %v242, %v298
  %300 = vmatmul.bf16.gmra.mxu0 %v280
  %v301 = vpop.f32.mrf.mxu0
  %v302 = vadd.f32 %v245, %v301
  %v303 = vpop.f32.mrf.mxu0
  %304 = vdwg.mxu0
  %v305 = vld [vmem:[#allocation2] sm:$0xe]
  %s306 = scalar_lea.vmem %s2, 64
  %v307 = vld [vmem:[%s306] sm:$0xf]
  %v308 = vld [vmem:[%s306 + $0x4] sm:$0xf]
  %v309 = vld [vmem:[%s306 + $0x8] sm:$0xf]
  %v310 = vld [vmem:[%s306 + $0xc] sm:$0xf]
  %v311 = vld [vmem:[%s306 + $0x10] sm:$0xf]
  %v312 = vld [vmem:[%s306 + $0x14] sm:$0xf]
  %v313 = vld [vmem:[%s306 + $0x18] sm:$0xf]
  %v314 = vld [vmem:[%s306 + $0x1c] sm:$0xf]
  %v316 = vunpack.c.l.b16 %v305
  %v317 = vpack.c.b16 %v160, %v316
  %vm318 = vcmask 1046528
  %v319 = vrot.slane %v317, 1
  %v320 = vrot.slane %v165, 1
  %v321 = vsel %vm318, %v319, %v320
  %v322 = vrot.slane %v166, 1
  %v323 = vsel %vm318, %v320, %v322
  %v332 = vunpack.c.l.b16 %v307
  %v333 = vunpack.c.l.b16 %v308
  %v334 = vunpack.c.l.b16 %v309
  %v335 = vunpack.c.l.b16 %v310
  %v336 = vunpack.c.l.b16 %v311
  %v337 = vunpack.c.l.b16 %v312
  %v338 = vunpack.c.l.b16 %v313
  %v339 = vunpack.c.l.b16 %v314
  %v340 = vpack.c.b16 %v333, %v332
  %v341 = vpack.c.b16 %v335, %v334
  %v342 = vpack.c.b16 %v337, %v336
  %v343 = vpack.c.b16 %v339, %v338
  %v349 = vsel %vm215, %v321, 0
  %v352 = vsel %vm215, %v323, 0
  %v355 = vsel %vm215, %v322, 0
  %357 = vmatpush.bf16.msra.mxu0 0
  %358 = vmatpush.bf16.msra.mxu0 0
  %359 = vmatpush.bf16.msra.mxu0 0
  %360 = vmatpush.bf16.msra.mxu0 0
  %361 = vmatpush.bf16.msra.mxu0 %v343
  %362 = vmatpush.bf16.msra.mxu0 %v342
  %363 = vmatpush.bf16.msra.mxu0 %v341
  %364 = vmatpush.bf16.msra.mxu0 %v340
  %365 = vmatmul.bf16.gmra.mxu0 %v349
  %v366 = vpop.f32.mrf.mxu0
  %v367 = vadd.f32 0.0, %v366
  %v368 = vpop.f32.mrf.mxu0
  %v369 = vadd.f32 0.0, %v368
  %370 = vmatmul.bf16.gmra.mxu0 %v352
  %v371 = vpop.f32.mrf.mxu0
  %v372 = vadd.f32 0.0, %v371
  %v373 = vpop.f32.mrf.mxu0
  %v374 = vadd.f32 0.0, %v373
  %375 = vmatmul.bf16.gmra.mxu0 %v355
  %v376 = vpop.f32.mrf.mxu0
  %v377 = vadd.f32 0.0, %v376
  %v378 = vpop.f32.mrf.mxu0
  %379 = vdwg.mxu0
  %v380 = vadd.f32 %v292, %v367
  %v381 = vadd.f32 %v294, %v369
  %v382 = vadd.f32 %v297, %v372
  %v383 = vadd.f32 %v299, %v374
  %v384 = vadd.f32 %v302, %v377
  %v385 = vld [vmem:[%s5 + $0x1] sm:$0x1]
  %v386 = vld [vmem:[%s5 + $0x2] sm:$0x1]
  %v387 = vperm.slane %v385, 0
  %v388 = vmul.f32 %v380, %v387
  %v389 = vmul.f32 %v381, %v387
  %v390 = vmul.f32 %v382, %v387
  %v391 = vmul.f32 %v383, %v387
  %v392 = vmul.f32 %v384, %v387
  %v393 = vperm.slane %v386, 0
  %v394 = vadd.f32 %v388, %v393
  %v395 = vadd.f32 %v389, %v393
  %v396 = vadd.f32 %v390, %v393
  %v397 = vadd.f32 %v391, %v393
  %v398 = vadd.f32 %v392, %v393
  %vm399 = vcmp.gt.f32.partialorder %v394, 0.0
  %vm400 = vcmp.gt.f32.partialorder %v395, 0.0
  %vm401 = vcmp.gt.f32.partialorder %v396, 0.0
  %vm402 = vcmp.gt.f32.partialorder %v397, 0.0
  %vm403 = vcmp.gt.f32.partialorder %v398, 0.0
  %v404 = vmul.f32 %v394, 0.1
  %v405 = vmul.f32 %v395, 0.1
  %v406 = vmul.f32 %v396, 0.1
  %v407 = vmul.f32 %v397, 0.1
  %v408 = vmul.f32 %v398, 0.1
  %v409 = vsel %vm399, %v394, %v404
  %v410 = vsel %vm400, %v395, %v405
  %v411 = vsel %vm401, %v396, %v406
  %v412 = vsel %vm402, %v397, %v407
  %v413 = vsel %vm403, %v398, %v408
  %v414 = vpack.c.bf16 %v409, %v409
  %v415 = vpack.c.bf16 %v410, %v410
  %v416 = vpack.c.bf16 %v411, %v411
  %vm417 = vsmask.f32 256
  %vm418 = vsmask.f32 4368
  %vm419 = vmor %vm417, %vm418
  %v421 = vshrl.u32 %v414, 16
  %v423 = vrot.slane %v421, 7
  %v424 = vshll.u32 %v414, 16
  %v426 = vor.u32 %v423, %v424
  %v427 = vrot.slane %v423, 4
  %v429 = vshrl.u32 %v415, 16
  %v431 = vrot.slane %v429, 7
  %v432 = vshll.u32 %v415, 16
  %v434 = vor.u32 %v431, %v432
  %v435 = vsel %vm419, %v427, %v434
  %v436 = vrot.slane %v431, 4
  %v438 = vshll.u32 %v416, 16
  %v440 = vsel %vm419, %v436, %v438
  %444 = vst [vmem:[#allocation3] sm:$0xe] %v426
  %445 = vst [vmem:[#allocation3 + $0x8] sm:$0xf] %v435
  %446 = vst [vmem:[#allocation3 + $0x10] sm:$0x1] %v440
  %v447 = vpack.c.bf16 %v412, %v412
  %v448 = vpack.c.bf16 %v413, %v413
  %v449 = vshrl.u32 %v416, 16
  %v451 = vrot.slane %v449, 7
  %v452 = vor.u32 %v451, %v438
  %v453 = vrot.slane %v451, 4
  %v455 = vshrl.u32 %v447, 16
  %v457 = vrot.slane %v455, 7
  %v458 = vshll.u32 %v447, 16
  %v460 = vor.u32 %v457, %v458
  %v461 = vsel %vm419, %v453, %v460
  %v462 = vrot.slane %v457, 4
  %v464 = vshrl.u32 %v448, 16
  %v466 = vrot.slane %v464, 7
  %v467 = vshll.u32 %v448, 16
  %v469 = vor.u32 %v466, %v467
  %v470 = vsel %vm419, %v462, %v469
  %474 = vst [vmem:[#allocation3 + $0x10] sm:$0x8] %v452
  %475 = vst [vmem:[#allocation3 + $0x18] sm:$0xf] %v461
  %476 = vst [vmem:[#allocation3 + $0x20] sm:$0x7] %v470
  %v477 = vld [vmem:[#allocation3] sm:$0xff]
  %v478 = vld [vmem:[#allocation3 + $0x8] sm:$0xff]
  %v479 = vld [vmem:[#allocation3 + $0x10] sm:$0xff]
  %v480 = vld [vmem:[#allocation3 + $0x18] sm:$0xff]
  %v481 = vld [vmem:[#allocation3 + $0x20] sm:$0x77]
  %v482 = vld [vmem:[%s3] sm:$0xf]
  %v483 = vld [vmem:[%s3 + $0x4] sm:$0xf]
  %v484 = vld [vmem:[%s3 + $0x8] sm:$0xf]
  %v485 = vld [vmem:[%s3 + $0xc] sm:$0xf]
  %v486 = vld [vmem:[%s3 + $0x10] sm:$0xf]
  %v487 = vld [vmem:[%s3 + $0x14] sm:$0xf]
  %v488 = vld [vmem:[%s3 + $0x18] sm:$0xf]
  %v489 = vld [vmem:[%s3 + $0x1c] sm:$0xf]
  %v490 = vld [vmem:[%s3 + $0x20] sm:$0xf]
  %v491 = vld [vmem:[%s3 + $0x24] sm:$0xf]
  %v492 = vld [vmem:[%s3 + $0x28] sm:$0xf]
  %v493 = vld [vmem:[%s3 + $0x2c] sm:$0xf]
  %v494 = vld [vmem:[%s3 + $0x30] sm:$0xf]
  %v495 = vld [vmem:[%s3 + $0x34] sm:$0xf]
  %v496 = vld [vmem:[%s3 + $0x38] sm:$0xf]
  %v497 = vld [vmem:[%s3 + $0x3c] sm:$0xf]
  %v498 = vld [vmem:[%s3 + $0x40] sm:$0xf]
  %v499 = vld [vmem:[%s3 + $0x44] sm:$0xf]
  %v500 = vld [vmem:[%s3 + $0x48] sm:$0xf]
  %v501 = vld [vmem:[%s3 + $0x4c] sm:$0xf]
  %v502 = vld [vmem:[%s3 + $0x50] sm:$0xf]
  %v503 = vld [vmem:[%s3 + $0x54] sm:$0xf]
  %v504 = vld [vmem:[%s3 + $0x58] sm:$0xf]
  %v505 = vld [vmem:[%s3 + $0x5c] sm:$0xf]
  %v506 = vld [vmem:[%s3 + $0x60] sm:$0xf]
  %v507 = vld [vmem:[%s3 + $0x64] sm:$0xf]
  %v508 = vld [vmem:[%s3 + $0x68] sm:$0xf]
  %v509 = vld [vmem:[%s3 + $0x6c] sm:$0xf]
  %v510 = vld [vmem:[%s3 + $0x70] sm:$0xf]
  %v511 = vld [vmem:[%s3 + $0x74] sm:$0xf]
  %v512 = vld [vmem:[%s3 + $0x78] sm:$0xf]
  %v513 = vld [vmem:[%s3 + $0x7c] sm:$0xf]
  %v514 = vld [vmem:[#allocation3 + $0x20] sm:$0xff]
  %s515 = scalar_lea.vmem %s3, 128
  %v516 = vld [vmem:[%s515] sm:$0xf]
  %v517 = vld [vmem:[%s515 + $0x4] sm:$0xf]
  %v518 = vld [vmem:[%s515 + $0x8] sm:$0xf]
  %v519 = vld [vmem:[%s515 + $0xc] sm:$0xf]
  %v520 = vld [vmem:[%s515 + $0x10] sm:$0xf]
  %v521 = vld [vmem:[%s515 + $0x14] sm:$0xf]
  %v522 = vld [vmem:[%s515 + $0x18] sm:$0xf]
  %v523 = vld [vmem:[%s515 + $0x1c] sm:$0xf]
  %v524 = vld [vmem:[%s515 + $0x20] sm:$0xf]
  %v525 = vld [vmem:[%s515 + $0x24] sm:$0xf]
  %v526 = vld [vmem:[%s515 + $0x28] sm:$0xf]
  %v527 = vld [vmem:[%s515 + $0x2c] sm:$0xf]
  %v528 = vld [vmem:[%s515 + $0x30] sm:$0xf]
  %v529 = vld [vmem:[%s515 + $0x34] sm:$0xf]
  %v530 = vld [vmem:[%s515 + $0x38] sm:$0xf]
  %v531 = vld [vmem:[%s515 + $0x3c] sm:$0xf]
  %v532 = vld [vmem:[%s515 + $0x40] sm:$0xf]
  %v533 = vld [vmem:[%s515 + $0x44] sm:$0xf]
  %v534 = vld [vmem:[%s515 + $0x48] sm:$0xf]
  %v535 = vld [vmem:[%s515 + $0x4c] sm:$0xf]
  %v536 = vld [vmem:[%s515 + $0x50] sm:$0xf]
  %v537 = vld [vmem:[%s515 + $0x54] sm:$0xf]
  %v538 = vld [vmem:[%s515 + $0x58] sm:$0xf]
  %v539 = vld [vmem:[%s515 + $0x5c] sm:$0xf]
  %v540 = vld [vmem:[%s515 + $0x60] sm:$0xf]
  %v541 = vld [vmem:[%s515 + $0x64] sm:$0xf]
  %v542 = vld [vmem:[%s515 + $0x68] sm:$0xf]
  %v543 = vld [vmem:[%s515 + $0x6c] sm:$0xf]
  %v544 = vld [vmem:[%s515 + $0x70] sm:$0xf]
  %v545 = vld [vmem:[%s515 + $0x74] sm:$0xf]
  %v546 = vld [vmem:[%s515 + $0x78] sm:$0xf]
  %v547 = vld [vmem:[%s515 + $0x7c] sm:$0xf]
  %v553 = vunpack.c.l.b16 %v477
  %v554 = vunpack.c.h.b16 %v477
  %v555 = vunpack.c.l.b16 %v478
  %v556 = vunpack.c.h.b16 %v478
  %v557 = vunpack.c.l.b16 %v479
  %v558 = vunpack.c.h.b16 %v479
  %v559 = vunpack.c.l.b16 %v480
  %v560 = vunpack.c.h.b16 %v480
  %v561 = vunpack.c.l.b16 %v514
  %v562 = vunpack.c.h.b16 %v514
  %v563 = vpack.c.b16 %v555, %v553
  %v564 = vpack.c.b16 %v556, %v554
  %v565 = vpack.c.b16 %v559, %v557
  %v566 = vpack.c.b16 %v560, %v558
  %v567 = vpack.c.b16 %v561, %v561
  %v568 = vpack.c.b16 %v562, %v562
  %v570 = vshrl.u32 %v563, 16
  %v572 = vshll.u32 %v563, 16
  %v574 = vrot.slane %v572, 1
  %v575 = vor.u32 %v570, %v574
  %v577 = vshll.u32 %v565, 16
  %v579 = vrot.slane %v577, 1
  %v580 = vsel %vm167, %v575, %v579
  %v582 = vshrl.u32 %v564, 16
  %v584 = vshll.u32 %v564, 16
  %v586 = vrot.slane %v584, 1
  %v587 = vor.u32 %v582, %v586
  %v589 = vshll.u32 %v566, 16
  %v591 = vrot.slane %v589, 1
  %v592 = vsel %vm167, %v587, %v591
  %v593 = vshrl.u32 %v565, 16
  %v595 = vor.u32 %v593, %v579
  %v597 = vshll.u32 %v567, 16
  %v599 = vrot.slane %v597, 1
  %v600 = vsel %vm167, %v595, %v599
  %v601 = vshrl.u32 %v566, 16
  %v603 = vor.u32 %v601, %v591
  %v605 = vshll.u32 %v568, 16
  %v607 = vrot.slane %v605, 1
  %v608 = vsel %vm167, %v603, %v607
  %v609 = vshrl.u32 %v567, 16
  %v611 = vor.u32 %v609, %v599
  %v612 = vshrl.u32 %v568, 16
  %v614 = vor.u32 %v612, %v607
  %v653 = vunpack.c.l.b16 %v516
  %v654 = vunpack.c.l.b16 %v517
  %v655 = vunpack.c.l.b16 %v518
  %v656 = vunpack.c.l.b16 %v519
  %v657 = vunpack.c.l.b16 %v520
  %v658 = vunpack.c.l.b16 %v521
  %v659 = vunpack.c.l.b16 %v522
  %v660 = vunpack.c.l.b16 %v523
  %v661 = vunpack.c.l.b16 %v524
  %v662 = vunpack.c.l.b16 %v525
  %v663 = vunpack.c.l.b16 %v526
  %v664 = vunpack.c.l.b16 %v527
  %v665 = vunpack.c.l.b16 %v528
  %v666 = vunpack.c.l.b16 %v529
  %v667 = vunpack.c.l.b16 %v530
  %v668 = vunpack.c.l.b16 %v531
  %v669 = vunpack.c.l.b16 %v532
  %v670 = vunpack.c.l.b16 %v533
  %v671 = vunpack.c.l.b16 %v534
  %v672 = vunpack.c.l.b16 %v535
  %v673 = vunpack.c.l.b16 %v536
  %v674 = vunpack.c.l.b16 %v537
  %v675 = vunpack.c.l.b16 %v538
  %v676 = vunpack.c.l.b16 %v539
  %v677 = vunpack.c.l.b16 %v540
  %v678 = vunpack.c.l.b16 %v541
  %v679 = vunpack.c.l.b16 %v542
  %v680 = vunpack.c.l.b16 %v543
  %v681 = vunpack.c.l.b16 %v544
  %v682 = vunpack.c.l.b16 %v545
  %v683 = vunpack.c.l.b16 %v546
  %v684 = vunpack.c.l.b16 %v547
  %v685 = vpack.c.b16 %v654, %v653
  %v686 = vpack.c.b16 %v656, %v655
  %v687 = vpack.c.b16 %v658, %v657
  %v688 = vpack.c.b16 %v660, %v659
  %v689 = vpack.c.b16 %v662, %v661
  %v690 = vpack.c.b16 %v664, %v663
  %v691 = vpack.c.b16 %v666, %v665
  %v692 = vpack.c.b16 %v668, %v667
  %v693 = vpack.c.b16 %v670, %v669
  %v694 = vpack.c.b16 %v672, %v671
  %v695 = vpack.c.b16 %v674, %v673
  %v696 = vpack.c.b16 %v676, %v675
  %v697 = vpack.c.b16 %v678, %v677
  %v698 = vpack.c.b16 %v680, %v679
  %v699 = vpack.c.b16 %v682, %v681
  %v700 = vpack.c.b16 %v684, %v683
  %717 = vmatpush.bf16.msra.mxu0 %v692
  %718 = vmatpush.bf16.msra.mxu0 %v691
  %719 = vmatpush.bf16.msra.mxu0 %v690
  %720 = vmatpush.bf16.msra.mxu0 %v689
  %721 = vmatpush.bf16.msra.mxu0 %v688
  %722 = vmatpush.bf16.msra.mxu0 %v687
  %723 = vmatpush.bf16.msra.mxu0 %v686
  %724 = vmatpush.bf16.msra.mxu0 %v685
  %725 = vmatmul.bf16.gmra.mxu0 %v580
  %v726 = vpop.f32.mrf.mxu0
  %v727 = vadd.f32 0.0, %v726
  %v728 = vpop.f32.mrf.mxu0
  %v729 = vadd.f32 0.0, %v728
  %730 = vmatmul.bf16.gmra.mxu0 %v600
  %v731 = vpop.f32.mrf.mxu0
  %v732 = vadd.f32 0.0, %v731
  %v733 = vpop.f32.mrf.mxu0
  %v734 = vadd.f32 0.0, %v733
  %735 = vmatmul.bf16.gmra.mxu0 %v611
  %v736 = vpop.f32.mrf.mxu0
  %v737 = vadd.f32 0.0, %v736
  %v738 = vpop.f32.mrf.mxu0
  %739 = vdwg.mxu0
  %740 = vmatpush.bf16.msra.mxu0 %v700
  %741 = vmatpush.bf16.msra.mxu0 %v699
  %742 = vmatpush.bf16.msra.mxu0 %v698
  %743 = vmatpush.bf16.msra.mxu0 %v697
  %744 = vmatpush.bf16.msra.mxu0 %v696
  %745 = vmatpush.bf16.msra.mxu0 %v695
  %746 = vmatpush.bf16.msra.mxu0 %v694
  %747 = vmatpush.bf16.msra.mxu0 %v693
  %748 = vmatmul.bf16.gmra.mxu0 %v592
  %v749 = vpop.f32.mrf.mxu0
  %v750 = vadd.f32 %v727, %v749
  %v751 = vpop.f32.mrf.mxu0
  %v752 = vadd.f32 %v729, %v751
  %753 = vmatmul.bf16.gmra.mxu0 %v608
  %v754 = vpop.f32.mrf.mxu0
  %v755 = vadd.f32 %v732, %v754
  %v756 = vpop.f32.mrf.mxu0
  %v757 = vadd.f32 %v734, %v756
  %758 = vmatmul.bf16.gmra.mxu0 %v614
  %v759 = vpop.f32.mrf.mxu0
  %v760 = vadd.f32 %v737, %v759
  %v761 = vpop.f32.mrf.mxu0
  %762 = vdwg.mxu0
  %v764 = vunpack.c.l.b16 %v481
  %v765 = vunpack.c.h.b16 %v481
  %v766 = vpack.c.b16 %v764, %v764
  %v767 = vpack.c.b16 %v765, %v765
  %v806 = vunpack.c.l.b16 %v482
  %v807 = vunpack.c.l.b16 %v483
  %v808 = vunpack.c.l.b16 %v484
  %v809 = vunpack.c.l.b16 %v485
  %v810 = vunpack.c.l.b16 %v486
  %v811 = vunpack.c.l.b16 %v487
  %v812 = vunpack.c.l.b16 %v488
  %v813 = vunpack.c.l.b16 %v489
  %v814 = vunpack.c.l.b16 %v490
  %v815 = vunpack.c.l.b16 %v491
  %v816 = vunpack.c.l.b16 %v492
  %v817 = vunpack.c.l.b16 %v493
  %v818 = vunpack.c.l.b16 %v494
  %v819 = vunpack.c.l.b16 %v495
  %v820 = vunpack.c.l.b16 %v496
  %v821 = vunpack.c.l.b16 %v497
  %v822 = vunpack.c.l.b16 %v498
  %v823 = vunpack.c.l.b16 %v499
  %v824 = vunpack.c.l.b16 %v500
  %v825 = vunpack.c.l.b16 %v501
  %v826 = vunpack.c.l.b16 %v502
  %v827 = vunpack.c.l.b16 %v503
  %v828 = vunpack.c.l.b16 %v504
  %v829 = vunpack.c.l.b16 %v505
  %v830 = vunpack.c.l.b16 %v506
  %v831 = vunpack.c.l.b16 %v507
  %v832 = vunpack.c.l.b16 %v508
  %v833 = vunpack.c.l.b16 %v509
  %v834 = vunpack.c.l.b16 %v510
  %v835 = vunpack.c.l.b16 %v511
  %v836 = vunpack.c.l.b16 %v512
  %v837 = vunpack.c.l.b16 %v513
  %v838 = vpack.c.b16 %v807, %v806
  %v839 = vpack.c.b16 %v809, %v808
  %v840 = vpack.c.b16 %v811, %v810
  %v841 = vpack.c.b16 %v813, %v812
  %v842 = vpack.c.b16 %v815, %v814
  %v843 = vpack.c.b16 %v817, %v816
  %v844 = vpack.c.b16 %v819, %v818
  %v845 = vpack.c.b16 %v821, %v820
  %v846 = vpack.c.b16 %v823, %v822
  %v847 = vpack.c.b16 %v825, %v824
  %v848 = vpack.c.b16 %v827, %v826
  %v849 = vpack.c.b16 %v829, %v828
  %v850 = vpack.c.b16 %v831, %v830
  %v851 = vpack.c.b16 %v833, %v832
  %v852 = vpack.c.b16 %v835, %v834
  %v853 = vpack.c.b16 %v837, %v836
  %870 = vmatpush.bf16.msra.mxu0 %v845
  %871 = vmatpush.bf16.msra.mxu0 %v844
  %872 = vmatpush.bf16.msra.mxu0 %v843
  %873 = vmatpush.bf16.msra.mxu0 %v842
  %874 = vmatpush.bf16.msra.mxu0 %v841
  %875 = vmatpush.bf16.msra.mxu0 %v840
  %876 = vmatpush.bf16.msra.mxu0 %v839
  %877 = vmatpush.bf16.msra.mxu0 %v838
  %878 = vmatmul.bf16.gmra.mxu0 %v563
  %v879 = vpop.f32.mrf.mxu0
  %v880 = vadd.f32 %v750, %v879
  %v881 = vpop.f32.mrf.mxu0
  %v882 = vadd.f32 %v752, %v881
  %883 = vmatmul.bf16.gmra.mxu0 %v565
  %v884 = vpop.f32.mrf.mxu0
  %v885 = vadd.f32 %v755, %v884
  %v886 = vpop.f32.mrf.mxu0
  %v887 = vadd.f32 %v757, %v886
  %888 = vmatmul.bf16.gmra.mxu0 %v766
  %v889 = vpop.f32.mrf.mxu0
  %v890 = vadd.f32 %v760, %v889
  %v891 = vpop.f32.mrf.mxu0
  %892 = vdwg.mxu0
  %893 = vmatpush.bf16.msra.mxu0 %v853
  %894 = vmatpush.bf16.msra.mxu0 %v852
  %895 = vmatpush.bf16.msra.mxu0 %v851
  %896 = vmatpush.bf16.msra.mxu0 %v850
  %897 = vmatpush.bf16.msra.mxu0 %v849
  %898 = vmatpush.bf16.msra.mxu0 %v848
  %899 = vmatpush.bf16.msra.mxu0 %v847
  %900 = vmatpush.bf16.msra.mxu0 %v846
  %901 = vmatmul.bf16.gmra.mxu0 %v564
  %v902 = vpop.f32.mrf.mxu0
  %v903 = vadd.f32 %v880, %v902
  %v904 = vpop.f32.mrf.mxu0
  %v905 = vadd.f32 %v882, %v904
  %906 = vmatmul.bf16.gmra.mxu0 %v566
  %v907 = vpop.f32.mrf.mxu0
  %v908 = vadd.f32 %v885, %v907
  %v909 = vpop.f32.mrf.mxu0
  %v910 = vadd.f32 %v887, %v909
  %911 = vmatmul.bf16.gmra.mxu0 %v767
  %v912 = vpop.f32.mrf.mxu0
  %v913 = vadd.f32 %v890, %v912
  %v914 = vpop.f32.mrf.mxu0
  %915 = vdwg.mxu0
  %v916 = vld [vmem:[#allocation3] sm:$0xee]
  %s917 = scalar_lea.vmem %s3, 256
  %v918 = vld [vmem:[%s917] sm:$0xf]
  %v919 = vld [vmem:[%s917 + $0x4] sm:$0xf]
  %v920 = vld [vmem:[%s917 + $0x8] sm:$0xf]
  %v921 = vld [vmem:[%s917 + $0xc] sm:$0xf]
  %v922 = vld [vmem:[%s917 + $0x10] sm:$0xf]
  %v923 = vld [vmem:[%s917 + $0x14] sm:$0xf]
  %v924 = vld [vmem:[%s917 + $0x18] sm:$0xf]
  %v925 = vld [vmem:[%s917 + $0x1c] sm:$0xf]
  %v926 = vld [vmem:[%s917 + $0x20] sm:$0xf]
  %v927 = vld [vmem:[%s917 + $0x24] sm:$0xf]
  %v928 = vld [vmem:[%s917 + $0x28] sm:$0xf]
  %v929 = vld [vmem:[%s917 + $0x2c] sm:$0xf]
  %v930 = vld [vmem:[%s917 + $0x30] sm:$0xf]
  %v931 = vld [vmem:[%s917 + $0x34] sm:$0xf]
  %v932 = vld [vmem:[%s917 + $0x38] sm:$0xf]
  %v933 = vld [vmem:[%s917 + $0x3c] sm:$0xf]
  %v934 = vld [vmem:[%s917 + $0x40] sm:$0xf]
  %v935 = vld [vmem:[%s917 + $0x44] sm:$0xf]
  %v936 = vld [vmem:[%s917 + $0x48] sm:$0xf]
  %v937 = vld [vmem:[%s917 + $0x4c] sm:$0xf]
  %v938 = vld [vmem:[%s917 + $0x50] sm:$0xf]
  %v939 = vld [vmem:[%s917 + $0x54] sm:$0xf]
  %v940 = vld [vmem:[%s917 + $0x58] sm:$0xf]
  %v941 = vld [vmem:[%s917 + $0x5c] sm:$0xf]
  %v942 = vld [vmem:[%s917 + $0x60] sm:$0xf]
  %v943 = vld [vmem:[%s917 + $0x64] sm:$0xf]
  %v944 = vld [vmem:[%s917 + $0x68] sm:$0xf]
  %v945 = vld [vmem:[%s917 + $0x6c] sm:$0xf]
  %v946 = vld [vmem:[%s917 + $0x70] sm:$0xf]
  %v947 = vld [vmem:[%s917 + $0x74] sm:$0xf]
  %v948 = vld [vmem:[%s917 + $0x78] sm:$0xf]
  %v949 = vld [vmem:[%s917 + $0x7c] sm:$0xf]
  %v951 = vunpack.c.l.b16 %v916
  %v952 = vunpack.c.h.b16 %v916
  %v953 = vpack.c.b16 %v555, %v951
  %v954 = vpack.c.b16 %v556, %v952
  %v955 = vrot.slane %v953, 1
  %v956 = vrot.slane %v565, 1
  %v957 = vsel %vm318, %v955, %v956
  %v958 = vrot.slane %v954, 1
  %v959 = vrot.slane %v566, 1
  %v960 = vsel %vm318, %v958, %v959
  %v961 = vrot.slane %v567, 1
  %v962 = vsel %vm318, %v956, %v961
  %v963 = vrot.slane %v568, 1
  %v964 = vsel %vm318, %v959, %v963
  %v1003 = vunpack.c.l.b16 %v918
  %v1004 = vunpack.c.l.b16 %v919
  %v1005 = vunpack.c.l.b16 %v920
  %v1006 = vunpack.c.l.b16 %v921
  %v1007 = vunpack.c.l.b16 %v922
  %v1008 = vunpack.c.l.b16 %v923
  %v1009 = vunpack.c.l.b16 %v924
  %v1010 = vunpack.c.l.b16 %v925
  %v1011 = vunpack.c.l.b16 %v926
  %v1012 = vunpack.c.l.b16 %v927
  %v1013 = vunpack.c.l.b16 %v928
  %v1014 = vunpack.c.l.b16 %v929
  %v1015 = vunpack.c.l.b16 %v930
  %v1016 = vunpack.c.l.b16 %v931
  %v1017 = vunpack.c.l.b16 %v932
  %v1018 = vunpack.c.l.b16 %v933
  %v1019 = vunpack.c.l.b16 %v934
  %v1020 = vunpack.c.l.b16 %v935
  %v1021 = vunpack.c.l.b16 %v936
  %v1022 = vunpack.c.l.b16 %v937
  %v1023 = vunpack.c.l.b16 %v938
  %v1024 = vunpack.c.l.b16 %v939
  %v1025 = vunpack.c.l.b16 %v940
  %v1026 = vunpack.c.l.b16 %v941
  %v1027 = vunpack.c.l.b16 %v942
  %v1028 = vunpack.c.l.b16 %v943
  %v1029 = vunpack.c.l.b16 %v944
  %v1030 = vunpack.c.l.b16 %v945
  %v1031 = vunpack.c.l.b16 %v946
  %v1032 = vunpack.c.l.b16 %v947
  %v1033 = vunpack.c.l.b16 %v948
  %v1034 = vunpack.c.l.b16 %v949
  %v1035 = vpack.c.b16 %v1004, %v1003
  %v1036 = vpack.c.b16 %v1006, %v1005
  %v1037 = vpack.c.b16 %v1008, %v1007
  %v1038 = vpack.c.b16 %v1010, %v1009
  %v1039 = vpack.c.b16 %v1012, %v1011
  %v1040 = vpack.c.b16 %v1014, %v1013
  %v1041 = vpack.c.b16 %v1016, %v1015
  %v1042 = vpack.c.b16 %v1018, %v1017
  %v1043 = vpack.c.b16 %v1020, %v1019
  %v1044 = vpack.c.b16 %v1022, %v1021
  %v1045 = vpack.c.b16 %v1024, %v1023
  %v1046 = vpack.c.b16 %v1026, %v1025
  %v1047 = vpack.c.b16 %v1028, %v1027
  %v1048 = vpack.c.b16 %v1030, %v1029
  %v1049 = vpack.c.b16 %v1032, %v1031
  %v1050 = vpack.c.b16 %v1034, %v1033
  %1067 = vmatpush.bf16.msra.mxu0 %v1042
  %1068 = vmatpush.bf16.msra.mxu0 %v1041
  %1069 = vmatpush.bf16.msra.mxu0 %v1040
  %1070 = vmatpush.bf16.msra.mxu0 %v1039
  %1071 = vmatpush.bf16.msra.mxu0 %v1038
  %1072 = vmatpush.bf16.msra.mxu0 %v1037
  %1073 = vmatpush.bf16.msra.mxu0 %v1036
  %1074 = vmatpush.bf16.msra.mxu0 %v1035
  %1075 = vmatmul.bf16.gmra.mxu0 %v957
  %v1076 = vpop.f32.mrf.mxu0
  %v1077 = vadd.f32 0.0, %v1076
  %v1078 = vpop.f32.mrf.mxu0
  %v1079 = vadd.f32 0.0, %v1078
  %1080 = vmatmul.bf16.gmra.mxu0 %v962
  %v1081 = vpop.f32.mrf.mxu0
  %v1082 = vadd.f32 0.0, %v1081
  %v1083 = vpop.f32.mrf.mxu0
  %v1084 = vadd.f32 0.0, %v1083
  %1085 = vmatmul.bf16.gmra.mxu0 %v961
  %v1086 = vpop.f32.mrf.mxu0
  %v1087 = vadd.f32 0.0, %v1086
  %v1088 = vpop.f32.mrf.mxu0
  %1089 = vdwg.mxu0
  %1090 = vmatpush.bf16.msra.mxu0 %v1050
  %1091 = vmatpush.bf16.msra.mxu0 %v1049
  %1092 = vmatpush.bf16.msra.mxu0 %v1048
  %1093 = vmatpush.bf16.msra.mxu0 %v1047
  %1094 = vmatpush.bf16.msra.mxu0 %v1046
  %1095 = vmatpush.bf16.msra.mxu0 %v1045
  %1096 = vmatpush.bf16.msra.mxu0 %v1044
  %1097 = vmatpush.bf16.msra.mxu0 %v1043
  %1098 = vmatmul.bf16.gmra.mxu0 %v960
  %v1099 = vpop.f32.mrf.mxu0
  %v1100 = vadd.f32 %v1077, %v1099
  %v1101 = vpop.f32.mrf.mxu0
  %v1102 = vadd.f32 %v1079, %v1101
  %1103 = vmatmul.bf16.gmra.mxu0 %v964
  %v1104 = vpop.f32.mrf.mxu0
  %v1105 = vadd.f32 %v1082, %v1104
  %v1106 = vpop.f32.mrf.mxu0
  %v1107 = vadd.f32 %v1084, %v1106
  %1108 = vmatmul.bf16.gmra.mxu0 %v963
  %v1109 = vpop.f32.mrf.mxu0
  %v1110 = vadd.f32 %v1087, %v1109
  %v1111 = vpop.f32.mrf.mxu0
  %1112 = vdwg.mxu0
  %v1113 = vadd.f32 %v903, %v1100
  %v1114 = vadd.f32 %v905, %v1102
  %v1115 = vadd.f32 %v908, %v1105
  %v1116 = vadd.f32 %v910, %v1107
  %v1117 = vadd.f32 %v913, %v1110
  %v1118 = vld [vmem:[%s6 + $0x1] sm:$0x1]
  %v1119 = vld [vmem:[%s6 + $0x2] sm:$0x1]
  %v1120 = vld [vmem:[%s6] sm:$0x1]
  %v1121 = vperm.slane %v1120, 0
  %v1122 = vadd.f32 %v1113, %v1121
  %v1123 = vadd.f32 %v1114, %v1121
  %v1124 = vadd.f32 %v1115, %v1121
  %v1125 = vadd.f32 %v1116, %v1121
  %v1126 = vadd.f32 %v1117, %v1121
  %vm1127 = vcmp.gt.f32.partialorder %v1122, 0.0
  %vm1128 = vcmp.gt.f32.partialorder %v1123, 0.0
  %vm1129 = vcmp.gt.f32.partialorder %v1124, 0.0
  %vm1130 = vcmp.gt.f32.partialorder %v1125, 0.0
  %vm1131 = vcmp.gt.f32.partialorder %v1126, 0.0
  %v1132 = vmul.f32 %v1122, 0.1
  %v1133 = vmul.f32 %v1123, 0.1
  %v1134 = vmul.f32 %v1124, 0.1
  %v1135 = vmul.f32 %v1125, 0.1
  %v1136 = vmul.f32 %v1126, 0.1
  %v1137 = vsel %vm1127, %v1122, %v1132
  %v1138 = vsel %vm1128, %v1123, %v1133
  %v1139 = vsel %vm1129, %v1124, %v1134
  %v1140 = vsel %vm1130, %v1125, %v1135
  %v1141 = vsel %vm1131, %v1126, %v1136
  %v1142 = vperm.slane %v1118, 0
  %v1143 = vmul.f32 %v1137, %v1142
  %v1144 = vmul.f32 %v1138, %v1142
  %v1145 = vmul.f32 %v1139, %v1142
  %v1146 = vmul.f32 %v1140, %v1142
  %v1147 = vmul.f32 %v1141, %v1142
  %v1148 = vperm.slane %v1119, 0
  %v1149 = vadd.f32 %v1143, %v1148
  %v1150 = vadd.f32 %v1144, %v1148
  %v1151 = vadd.f32 %v1145, %v1148
  %v1152 = vadd.f32 %v1146, %v1148
  %v1153 = vadd.f32 %v1147, %v1148
  %v1154 = vpack.c.bf16 %v1149, %v1149
  %v1155 = vpack.c.bf16 %v1150, %v1150
  %v1156 = vpack.c.bf16 %v1151, %v1151
  %v1158 = vshrl.u32 %v1154, 16
  %v1160 = vrot.slane %v1158, 7
  %v1161 = vshll.u32 %v1154, 16
  %v1163 = vor.u32 %v1160, %v1161
  %v1164 = vrot.slane %v1160, 4
  %v1166 = vshrl.u32 %v1155, 16
  %v1168 = vrot.slane %v1166, 7
  %v1169 = vshll.u32 %v1155, 16
  %v1171 = vor.u32 %v1168, %v1169
  %v1172 = vsel %vm419, %v1164, %v1171
  %v1173 = vrot.slane %v1168, 4
  %v1175 = vshll.u32 %v1156, 16
  %v1177 = vsel %vm419, %v1173, %v1175
  %1181 = vst [vmem:[#allocation4] sm:$0xe] %v1163
  %1182 = vst [vmem:[#allocation4 + $0x4] sm:$0xf] %v1172
  %1183 = vst [vmem:[#allocation4 + $0x8] sm:$0x1] %v1177
  %v1184 = vpack.c.bf16 %v1152, %v1152
  %v1185 = vpack.c.bf16 %v1153, %v1153
  %v1186 = vshrl.u32 %v1156, 16
  %v1188 = vrot.slane %v1186, 7
  %v1189 = vor.u32 %v1188, %v1175
  %v1190 = vrot.slane %v1188, 4
  %v1192 = vshrl.u32 %v1184, 16
  %v1194 = vrot.slane %v1192, 7
  %v1195 = vshll.u32 %v1184, 16
  %v1197 = vor.u32 %v1194, %v1195
  %v1198 = vsel %vm419, %v1190, %v1197
  %v1199 = vrot.slane %v1194, 4
  %v1201 = vshrl.u32 %v1185, 16
  %v1203 = vrot.slane %v1201, 7
  %v1204 = vshll.u32 %v1185, 16
  %v1206 = vor.u32 %v1203, %v1204
  %v1207 = vsel %vm419, %v1199, %v1206
  %1211 = vst [vmem:[#allocation4 + $0x8] sm:$0x8] %v1189
  %1212 = vst [vmem:[#allocation4 + $0xc] sm:$0xf] %v1198
  %1213 = vst [vmem:[#allocation4 + $0x10] sm:$0x7] %v1207
  %v1214 = vld [vmem:[#allocation4] sm:$0xf]
  %v1215 = vld [vmem:[#allocation4 + $0x4] sm:$0xf]
  %v1216 = vld [vmem:[#allocation4 + $0x8] sm:$0xf]
  %v1217 = vld [vmem:[#allocation4 + $0xc] sm:$0xf]
  %v1218 = vld [vmem:[#allocation4 + $0x10] sm:$0x7]
  %v1219 = vld [vmem:[%s4] sm:$0xf]
  %v1220 = vld [vmem:[%s4 + $0x4] sm:$0xf]
  %v1221 = vld [vmem:[%s4 + $0x8] sm:$0xf]
  %v1222 = vld [vmem:[%s4 + $0xc] sm:$0xf]
  %v1223 = vld [vmem:[%s4 + $0x10] sm:$0xf]
  %v1224 = vld [vmem:[%s4 + $0x14] sm:$0xf]
  %v1225 = vld [vmem:[%s4 + $0x18] sm:$0xf]
  %v1226 = vld [vmem:[%s4 + $0x1c] sm:$0xf]
  %v1227 = vld [vmem:[%s4 + $0x20] sm:$0xf]
  %v1228 = vld [vmem:[%s4 + $0x24] sm:$0xf]
  %v1229 = vld [vmem:[%s4 + $0x28] sm:$0xf]
  %v1230 = vld [vmem:[%s4 + $0x2c] sm:$0xf]
  %v1231 = vld [vmem:[%s4 + $0x30] sm:$0xf]
  %v1232 = vld [vmem:[%s4 + $0x34] sm:$0xf]
  %v1233 = vld [vmem:[%s4 + $0x38] sm:$0xf]
  %v1234 = vld [vmem:[%s4 + $0x3c] sm:$0xf]
  %v1235 = vld [vmem:[#allocation4 + $0x10] sm:$0xf]
  %s1236 = scalar_lea.vmem %s4, 64
  %v1237 = vld [vmem:[%s1236] sm:$0xf]
  %v1238 = vld [vmem:[%s1236 + $0x4] sm:$0xf]
  %v1239 = vld [vmem:[%s1236 + $0x8] sm:$0xf]
  %v1240 = vld [vmem:[%s1236 + $0xc] sm:$0xf]
  %v1241 = vld [vmem:[%s1236 + $0x10] sm:$0xf]
  %v1242 = vld [vmem:[%s1236 + $0x14] sm:$0xf]
  %v1243 = vld [vmem:[%s1236 + $0x18] sm:$0xf]
  %v1244 = vld [vmem:[%s1236 + $0x1c] sm:$0xf]
  %v1245 = vld [vmem:[%s1236 + $0x20] sm:$0xf]
  %v1246 = vld [vmem:[%s1236 + $0x24] sm:$0xf]
  %v1247 = vld [vmem:[%s1236 + $0x28] sm:$0xf]
  %v1248 = vld [vmem:[%s1236 + $0x2c] sm:$0xf]
  %v1249 = vld [vmem:[%s1236 + $0x30] sm:$0xf]
  %v1250 = vld [vmem:[%s1236 + $0x34] sm:$0xf]
  %v1251 = vld [vmem:[%s1236 + $0x38] sm:$0xf]
  %v1252 = vld [vmem:[%s1236 + $0x3c] sm:$0xf]
  %v1258 = vunpack.c.l.b16 %v1214
  %v1259 = vunpack.c.l.b16 %v1215
  %v1260 = vunpack.c.l.b16 %v1216
  %v1261 = vunpack.c.l.b16 %v1217
  %v1262 = vunpack.c.l.b16 %v1235
  %v1263 = vpack.c.b16 %v1259, %v1258
  %v1264 = vpack.c.b16 %v1261, %v1260
  %v1265 = vpack.c.b16 %v1262, %v1262
  %v1267 = vshrl.u32 %v1263, 16
  %v1269 = vshll.u32 %v1263, 16
  %v1271 = vrot.slane %v1269, 1
  %v1272 = vor.u32 %v1267, %v1271
  %v1274 = vshll.u32 %v1264, 16
  %v1276 = vrot.slane %v1274, 1
  %v1277 = vsel %vm167, %v1272, %v1276
  %v1278 = vshrl.u32 %v1264, 16
  %v1280 = vor.u32 %v1278, %v1276
  %v1282 = vshll.u32 %v1265, 16
  %v1284 = vrot.slane %v1282, 1
  %v1285 = vsel %vm167, %v1280, %v1284
  %v1286 = vshrl.u32 %v1265, 16
  %v1288 = vor.u32 %v1286, %v1284
  %v1308 = vunpack.c.l.b16 %v1237
  %v1309 = vunpack.c.l.b16 %v1238
  %v1310 = vunpack.c.l.b16 %v1239
  %v1311 = vunpack.c.l.b16 %v1240
  %v1312 = vunpack.c.l.b16 %v1241
  %v1313 = vunpack.c.l.b16 %v1242
  %v1314 = vunpack.c.l.b16 %v1243
  %v1315 = vunpack.c.l.b16 %v1244
  %v1316 = vunpack.c.l.b16 %v1245
  %v1317 = vunpack.c.l.b16 %v1246
  %v1318 = vunpack.c.l.b16 %v1247
  %v1319 = vunpack.c.l.b16 %v1248
  %v1320 = vunpack.c.l.b16 %v1249
  %v1321 = vunpack.c.l.b16 %v1250
  %v1322 = vunpack.c.l.b16 %v1251
  %v1323 = vunpack.c.l.b16 %v1252
  %v1324 = vpack.c.b16 %v1309, %v1308
  %v1325 = vpack.c.b16 %v1311, %v1310
  %v1326 = vpack.c.b16 %v1313, %v1312
  %v1327 = vpack.c.b16 %v1315, %v1314
  %v1328 = vpack.c.b16 %v1317, %v1316
  %v1329 = vpack.c.b16 %v1319, %v1318
  %v1330 = vpack.c.b16 %v1321, %v1320
  %v1331 = vpack.c.b16 %v1323, %v1322
  %1340 = vmatpush.bf16.msra.mxu0 %v1331
  %1341 = vmatpush.bf16.msra.mxu0 %v1330
  %1342 = vmatpush.bf16.msra.mxu0 %v1329
  %1343 = vmatpush.bf16.msra.mxu0 %v1328
  %1344 = vmatpush.bf16.msra.mxu0 %v1327
  %1345 = vmatpush.bf16.msra.mxu0 %v1326
  %1346 = vmatpush.bf16.msra.mxu0 %v1325
  %1347 = vmatpush.bf16.msra.mxu0 %v1324
  %1348 = vmatmul.bf16.gmra.mxu0 %v1277
  %v1349 = vpop.f32.mrf.mxu0
  %v1350 = vadd.f32 0.0, %v1349
  %v1351 = vpop.f32.mrf.mxu0
  %v1352 = vadd.f32 0.0, %v1351
  %1353 = vmatmul.bf16.gmra.mxu0 %v1285
  %v1354 = vpop.f32.mrf.mxu0
  %v1355 = vadd.f32 0.0, %v1354
  %v1356 = vpop.f32.mrf.mxu0
  %v1357 = vadd.f32 0.0, %v1356
  %1358 = vmatmul.bf16.gmra.mxu0 %v1288
  %v1359 = vpop.f32.mrf.mxu0
  %v1360 = vadd.f32 0.0, %v1359
  %v1361 = vpop.f32.mrf.mxu0
  %1362 = vdwg.mxu0
  %v1364 = vunpack.c.l.b16 %v1218
  %v1365 = vpack.c.b16 %v1364, %v1364
  %v1385 = vunpack.c.l.b16 %v1219
  %v1386 = vunpack.c.l.b16 %v1220
  %v1387 = vunpack.c.l.b16 %v1221
  %v1388 = vunpack.c.l.b16 %v1222
  %v1389 = vunpack.c.l.b16 %v1223
  %v1390 = vunpack.c.l.b16 %v1224
  %v1391 = vunpack.c.l.b16 %v1225
  %v1392 = vunpack.c.l.b16 %v1226
  %v1393 = vunpack.c.l.b16 %v1227
  %v1394 = vunpack.c.l.b16 %v1228
  %v1395 = vunpack.c.l.b16 %v1229
  %v1396 = vunpack.c.l.b16 %v1230
  %v1397 = vunpack.c.l.b16 %v1231
  %v1398 = vunpack.c.l.b16 %v1232
  %v1399 = vunpack.c.l.b16 %v1233
  %v1400 = vunpack.c.l.b16 %v1234
  %v1401 = vpack.c.b16 %v1386, %v1385
  %v1402 = vpack.c.b16 %v1388, %v1387
  %v1403 = vpack.c.b16 %v1390, %v1389
  %v1404 = vpack.c.b16 %v1392, %v1391
  %v1405 = vpack.c.b16 %v1394, %v1393
  %v1406 = vpack.c.b16 %v1396, %v1395
  %v1407 = vpack.c.b16 %v1398, %v1397
  %v1408 = vpack.c.b16 %v1400, %v1399
  %1417 = vmatpush.bf16.msra.mxu0 %v1408
  %1418 = vmatpush.bf16.msra.mxu0 %v1407
  %1419 = vmatpush.bf16.msra.mxu0 %v1406
  %1420 = vmatpush.bf16.msra.mxu0 %v1405
  %1421 = vmatpush.bf16.msra.mxu0 %v1404
  %1422 = vmatpush.bf16.msra.mxu0 %v1403
  %1423 = vmatpush.bf16.msra.mxu0 %v1402
  %1424 = vmatpush.bf16.msra.mxu0 %v1401
  %1425 = vmatmul.bf16.gmra.mxu0 %v1263
  %v1426 = vpop.f32.mrf.mxu0
  %v1427 = vadd.f32 %v1350, %v1426
  %v1428 = vpop.f32.mrf.mxu0
  %v1429 = vadd.f32 %v1352, %v1428
  %1430 = vmatmul.bf16.gmra.mxu0 %v1264
  %v1431 = vpop.f32.mrf.mxu0
  %v1432 = vadd.f32 %v1355, %v1431
  %v1433 = vpop.f32.mrf.mxu0
  %v1434 = vadd.f32 %v1357, %v1433
  %1435 = vmatmul.bf16.gmra.mxu0 %v1365
  %v1436 = vpop.f32.mrf.mxu0
  %v1437 = vadd.f32 %v1360, %v1436
  %v1438 = vpop.f32.mrf.mxu0
  %1439 = vdwg.mxu0
  %v1440 = vld [vmem:[#allocation4] sm:$0xe]
  %s1441 = scalar_lea.vmem %s4, 128
  %v1442 = vld [vmem:[%s1441] sm:$0xf]
  %v1443 = vld [vmem:[%s1441 + $0x4] sm:$0xf]
  %v1444 = vld [vmem:[%s1441 + $0x8] sm:$0xf]
  %v1445 = vld [vmem:[%s1441 + $0xc] sm:$0xf]
  %v1446 = vld [vmem:[%s1441 + $0x10] sm:$0xf]
  %v1447 = vld [vmem:[%s1441 + $0x14] sm:$0xf]
  %v1448 = vld [vmem:[%s1441 + $0x18] sm:$0xf]
  %v1449 = vld [vmem:[%s1441 + $0x1c] sm:$0xf]
  %v1450 = vld [vmem:[%s1441 + $0x20] sm:$0xf]
  %v1451 = vld [vmem:[%s1441 + $0x24] sm:$0xf]
  %v1452 = vld [vmem:[%s1441 + $0x28] sm:$0xf]
  %v1453 = vld [vmem:[%s1441 + $0x2c] sm:$0xf]
  %v1454 = vld [vmem:[%s1441 + $0x30] sm:$0xf]
  %v1455 = vld [vmem:[%s1441 + $0x34] sm:$0xf]
  %v1456 = vld [vmem:[%s1441 + $0x38] sm:$0xf]
  %v1457 = vld [vmem:[%s1441 + $0x3c] sm:$0xf]
  %v1459 = vunpack.c.l.b16 %v1440
  %v1460 = vpack.c.b16 %v1259, %v1459
  %v1461 = vrot.slane %v1460, 1
  %v1462 = vrot.slane %v1264, 1
  %v1463 = vsel %vm318, %v1461, %v1462
  %v1464 = vrot.slane %v1265, 1
  %v1465 = vsel %vm318, %v1462, %v1464
  %v1485 = vunpack.c.l.b16 %v1442
  %v1486 = vunpack.c.l.b16 %v1443
  %v1487 = vunpack.c.l.b16 %v1444
  %v1488 = vunpack.c.l.b16 %v1445
  %v1489 = vunpack.c.l.b16 %v1446
  %v1490 = vunpack.c.l.b16 %v1447
  %v1491 = vunpack.c.l.b16 %v1448
  %v1492 = vunpack.c.l.b16 %v1449
  %v1493 = vunpack.c.l.b16 %v1450
  %v1494 = vunpack.c.l.b16 %v1451
  %v1495 = vunpack.c.l.b16 %v1452
  %v1496 = vunpack.c.l.b16 %v1453
  %v1497 = vunpack.c.l.b16 %v1454
  %v1498 = vunpack.c.l.b16 %v1455
  %v1499 = vunpack.c.l.b16 %v1456
  %v1500 = vunpack.c.l.b16 %v1457
  %v1501 = vpack.c.b16 %v1486, %v1485
  %v1502 = vpack.c.b16 %v1488, %v1487
  %v1503 = vpack.c.b16 %v1490, %v1489
  %v1504 = vpack.c.b16 %v1492, %v1491
  %v1505 = vpack.c.b16 %v1494, %v1493
  %v1506 = vpack.c.b16 %v1496, %v1495
  %v1507 = vpack.c.b16 %v1498, %v1497
  %v1508 = vpack.c.b16 %v1500, %v1499
  %1517 = vmatpush.bf16.msra.mxu0 %v1508
  %1518 = vmatpush.bf16.msra.mxu0 %v1507
  %1519 = vmatpush.bf16.msra.mxu0 %v1506
  %1520 = vmatpush.bf16.msra.mxu0 %v1505
  %1521 = vmatpush.bf16.msra.mxu0 %v1504
  %1522 = vmatpush.bf16.msra.mxu0 %v1503
  %1523 = vmatpush.bf16.msra.mxu0 %v1502
  %1524 = vmatpush.bf16.msra.mxu0 %v1501
  %1525 = vmatmul.bf16.gmra.mxu0 %v1463
  %v1526 = vpop.f32.mrf.mxu0
  %v1527 = vadd.f32 0.0, %v1526
  %v1528 = vpop.f32.mrf.mxu0
  %v1529 = vadd.f32 0.0, %v1528
  %1530 = vmatmul.bf16.gmra.mxu0 %v1465
  %v1531 = vpop.f32.mrf.mxu0
  %v1532 = vadd.f32 0.0, %v1531
  %v1533 = vpop.f32.mrf.mxu0
  %v1534 = vadd.f32 0.0, %v1533
  %1535 = vmatmul.bf16.gmra.mxu0 %v1464
  %v1536 = vpop.f32.mrf.mxu0
  %v1537 = vadd.f32 0.0, %v1536
  %v1538 = vpop.f32.mrf.mxu0
  %1539 = vdwg.mxu0
  %v1540 = vadd.f32 %v1427, %v1527
  %v1541 = vadd.f32 %v1429, %v1529
  %v1542 = vadd.f32 %v1432, %v1532
  %v1543 = vadd.f32 %v1434, %v1534
  %v1544 = vadd.f32 %v1437, %v1537
  %v1545 = vld [vmem:[%s7 + $0x1] sm:$0x1]
  %v1546 = vld [vmem:[%s7 + $0x2] sm:$0x1]
  %v1547 = vperm.slane %v1545, 0
  %v1548 = vmul.f32 %v1540, %v1547
  %v1549 = vmul.f32 %v1541, %v1547
  %v1550 = vmul.f32 %v1542, %v1547
  %v1551 = vmul.f32 %v1543, %v1547
  %v1552 = vmul.f32 %v1544, %v1547
  %v1553 = vperm.slane %v1546, 0
  %v1554 = vadd.f32 %v1548, %v1553
  %v1555 = vadd.f32 %v1549, %v1553
  %v1556 = vadd.f32 %v1550, %v1553
  %v1557 = vadd.f32 %v1551, %v1553
  %v1558 = vadd.f32 %v1552, %v1553
  %vm1559 = vcmp.gt.f32.partialorder %v1554, 0.0
  %vm1560 = vcmp.gt.f32.partialorder %v1555, 0.0
  %vm1561 = vcmp.gt.f32.partialorder %v1556, 0.0
  %vm1562 = vcmp.gt.f32.partialorder %v1557, 0.0
  %vm1563 = vcmp.gt.f32.partialorder %v1558, 0.0
  %v1564 = vmul.f32 %v1554, 0.1
  %v1565 = vmul.f32 %v1555, 0.1
  %v1566 = vmul.f32 %v1556, 0.1
  %v1567 = vmul.f32 %v1557, 0.1
  %v1568 = vmul.f32 %v1558, 0.1
  %v1569 = vsel %vm1559, %v1554, %v1564
  %v1570 = vsel %vm1560, %v1555, %v1565
  %v1571 = vsel %vm1561, %v1556, %v1566
  %v1572 = vsel %vm1562, %v1557, %v1567
  %v1573 = vsel %vm1563, %v1558, %v1568
  %v1574 = vpack.c.bf16 %v1569, %v1569
  %v1575 = vpack.c.bf16 %v1570, %v1570
  %v1576 = vpack.c.bf16 %v1571, %v1571
  %vm1577 = vsmask.f32 3328
  %vm1578 = vsmask.f32 7440
  %vm1579 = vmor %vm1577, %vm1578
  %v1581 = vshrl.u32 %v1574, 16
  %v1583 = vrot.slane %v1581, 4
  %v1584 = vshll.u32 %v1574, 16
  %v1586 = vrot.slane %v1584, 5
  %v1587 = vor.u32 %v1583, %v1586
  %v1588 = vrot.slane %v1587, 4
  %v1590 = vshll.u32 %v1575, 16
  %v1592 = vrot.slane %v1590, 5
  %v1593 = vsel %vm1579, %v1588, %v1592
  %v1594 = vshrl.u32 %v1575, 16
  %v1596 = vrot.slane %v1594, 4
  %v1597 = vor.u32 %v1596, %v1592
  %v1598 = vrot.slane %v1597, 4
  %v1600 = vshll.u32 %v1576, 16
  %v1602 = vrot.slane %v1600, 5
  %v1603 = vsel %vm1579, %v1598, %v1602
  %1606 = vst [vmem:[%s8] sm:$0xf] %v1593
  %1607 = vst [vmem:[%s8 + $0x4] sm:$0xf] %v1603
  %v1608 = vpack.c.bf16 %v1572, %v1572
  %v1609 = vpack.c.bf16 %v1573, %v1573
  %vm1610 = vsmask.f32 1280
  %vm1611 = vsmask.f32 5392
  %vm1612 = vmor %vm1610, %vm1611
  %v1613 = vshrl.u32 %v1576, 16
  %v1615 = vrot.slane %v1613, 6
  %v1616 = vrot.slane %v1600, 7
  %v1617 = vor.u32 %v1615, %v1616
  %v1618 = vrot.slane %v1617, 4
  %v1620 = vshrl.u32 %v1608, 16
  %v1622 = vrot.slane %v1620, 6
  %v1623 = vshll.u32 %v1608, 16
  %v1625 = vrot.slane %v1623, 7
  %v1626 = vor.u32 %v1622, %v1625
  %v1627 = vsel %vm1612, %v1618, %v1626
  %v1628 = vrot.slane %v1626, 4
  %v1630 = vshrl.u32 %v1609, 16
  %v1632 = vrot.slane %v1630, 6
  %v1633 = vshll.u32 %v1609, 16
  %v1635 = vrot.slane %v1633, 7
  %v1636 = vor.u32 %v1632, %v1635
  %v1637 = vsel %vm1612, %v1628, %v1636
  %s1640 = scalar_lea.vmem %s8, 8
  %1641 = vst [vmem:[%s1640] sm:$0xf] %v1627
  %1642 = vst [vmem:[%s1640 + $0x4] sm:$0xf] %v1637
  // Predicated region
  $region38: #{recurrent_block_forward.1} parent=0 // pred_check
    _
  $region39: #{recurrent_block_forward.1} parent=0 // pred_check_branch
    %1644 = sbr.rel (0) target = $region41
  $region40: #{recurrent_block_forward.1} parent=0 // pred_region
    _
  $region41: #{recurrent_block_forward.1} parent=0 // pred_fallthru
    _
  // Predicated region
  $region42: #{recurrent_block_forward.1} parent=0 // pred_check
    _
  $region43: #{recurrent_block_forward.1} parent=0 // pred_check_branch
    %1646 = sbr.rel (0) target = $region45
  $region44: #{recurrent_block_forward.1} parent=0 // pred_region
    _
  $region45: #{recurrent_block_forward.1} parent=0 // pred_fallthru
    _

</llo_original>
